<compile_context>
chip_gen: v6e
topology: v6e:2x2x1
jax: 0.10.0
libtpu: 0.0.40
codegen_flags: <defaults>
</compile_context>

<pallas_src>
import functools

import jax
import jax.numpy as jnp
from jax.experimental import pallas as pl
from jax.experimental.pallas import tpu as pltpu

LANE = 128
BIG = 1e30  # additive penalty that pushes padded rows' d^2 -> sim ~ 0


def _round_up(x, m):
    return ((x + m - 1) // m) * m


# ---------------------------------------------------------------------------
# Fused kernel: extractor + prototype classifier for B images per grid step.
# ---------------------------------------------------------------------------
def _cabrnet_fused_kernel(x_ref, wconv_ref, bconv_ref, waddon_ref, baddon_ref,
                          protot_ref, psq_ref, wlast_ref, sims_ref, logits_ref,
                          *, n_valid_rows, eps):
    """One grid step = B images.

    x_ref     : (B, R_pad, 9*C) bf16  im2col pixels (taps folded into lanes)
    wconv_ref : (9*C, F)        bf16  3x3 conv weight (taps folded into K)
    bconv_ref : (1, F)          f32
    waddon_ref: (F, D)          bf16  1x1 add-on conv weight
    baddon_ref: (1, D)          f32
    protot_ref: (D, P_pad)      f32   prototypes^T, zero-padded to 128 lanes
    psq_ref   : (1, P_pad)      f32   ||p||^2 (0 in the padding)
    wlast_ref : (P_pad, C_pad)  f32   last layer, zero-padded
    sims_ref  : (B, 1, P_pad)   f32   max similarity per prototype
    logits_ref: (B, 1, C_pad)   f32   class logits
    """
    B, R_pad, K = x_ref.shape
    P_pad = protot_ref.shape[1]

    # --- 3x3 conv (pad 1) + ReLU: ONE bf16 K=9*C matmul over all B*R_pad rows.
    x = x_ref[...].reshape(B * R_pad, K)
    conv = jnp.dot(x, wconv_ref[...], preferred_element_type=jnp.float32)
    conv = jnp.maximum(conv + bconv_ref[...], 0.0)                 # (B*R, F)

    # --- 1x1 add-on conv + sigmoid (bf16 MXU inputs, f32 accumulation). ---
    feat = jnp.dot(conv.astype(jnp.bfloat16), waddon_ref[...],
                   preferred_element_type=jnp.float32) + baddon_ref[...]
    feat = jax.nn.sigmoid(feat)                                    # (B*R, D) f32

    # --- squared L2 distances: ||f||^2 - 2 f.p + ||p||^2 (f32 cross term:
    #     bf16 error would be amplified by ~1/eps near d2 ~ 0). ---
    f_sq = jnp.sum(feat * feat, axis=1, keepdims=True)             # (B*R, 1)
    if R_pad > n_valid_rows:
        # Padded rows (past H*W) are pushed to huge d^2 -> sim ~ 0, which can
        # never win the max against a real location.
        row = jax.lax.broadcasted_iota(jnp.int32, (B * R_pad, 1), 0)
        f_sq = f_sq + jnp.where(row % R_pad >= n_valid_rows, BIG, 0.0)
    cross = jnp.dot(feat, protot_ref[...],
                    preferred_element_type=jnp.float32)            # (B*R, P_pad)
    d2 = jnp.maximum(f_sq - 2.0 * cross + psq_ref[...], 0.0)

    # ProtoPNet similarity with a single log + approx EUP reciprocal:
    #   log((d2+1)/(d2+eps)) = log(1 + (1-eps)/(d2+eps))
    sim = jnp.log(1.0 + (1.0 - eps) * pl.reciprocal(d2 + eps, approx=True))

    # Spatial max-pool per image, then the last linear layer.
    smax = jnp.max(sim.reshape(B, R_pad, P_pad), axis=1)           # (B, P_pad)
    sims_ref[...] = smax[:, None, :]
    logits_ref[...] = jnp.dot(smax, wlast_ref[...],
                              preferred_element_type=jnp.float32)[:, None, :]


def _cabrnet_pallas_call(x_cols, w_conv, b_conv, w_addon, b_addon,
                         protot, p_sq, w_last, *, imgs_per_step, n_valid_rows,
                         eps):
    N_pad, R_pad, K = x_cols.shape
    F = w_conv.shape[1]
    D = w_addon.shape[1]
    P_pad = protot.shape[1]
    C_pad = w_last.shape[1]
    B = imgs_per_step

    kernel = functools.partial(_cabrnet_fused_kernel,
                               n_valid_rows=n_valid_rows, eps=eps)
    sims, logits = pl.pallas_call(
        kernel,
        out_shape=(jax.ShapeDtypeStruct((N_pad, 1, P_pad), jnp.float32),
                   jax.ShapeDtypeStruct((N_pad, 1, C_pad), jnp.float32)),
        grid=(N_pad // B,),
        in_specs=[
            pl.BlockSpec((B, R_pad, K), lambda n: (n, 0, 0)),   # im2col pixels
            pl.BlockSpec((K, F), lambda n: (0, 0)),             # conv weight
            pl.BlockSpec((1, F), lambda n: (0, 0)),             # conv bias
            pl.BlockSpec((F, D), lambda n: (0, 0)),             # add-on weight
            pl.BlockSpec((1, D), lambda n: (0, 0)),             # add-on bias
            pl.BlockSpec((D, P_pad), lambda n: (0, 0)),         # prototypes^T
            pl.BlockSpec((1, P_pad), lambda n: (0, 0)),         # ||p||^2
            pl.BlockSpec((P_pad, C_pad), lambda n: (0, 0)),     # last layer
        ],
        out_specs=(pl.BlockSpec((B, 1, P_pad), lambda n: (n, 0, 0)),
                   pl.BlockSpec((B, 1, C_pad), lambda n: (n, 0, 0))),
        compiler_params=pltpu.CompilerParams(
            dimension_semantics=("parallel",)),
    )(x_cols, w_conv, b_conv, w_addon, b_addon, protot, p_sq, w_last)
    return sims, logits


# ---------------------------------------------------------------------------
# Host-side glue (jitted): NCHW -> lane-dense im2col slab, then one kernel call.
# ---------------------------------------------------------------------------
@functools.partial(jax.jit,
                   static_argnames=("num_prototypes", "num_classes", "eps"))
def cabrnet_apply(x_nchw, params, *, num_prototypes, num_classes, eps):
    (w_conv, b_conv, w_addon, b_addon, protot, p_sq, w_last) = params
    x = jnp.transpose(x_nchw, (0, 2, 3, 1)).astype(jnp.float32)      # NHWC
    N, H, W, C = x.shape
    R = H * W
    R_pad = _round_up(R, 16)          # bf16 sublane packing friendly

    # im2col with the 9 conv taps folded into the minor (lane) dim -> (N, R, 9C)
    # so the whole conv becomes a single bf16 K=9*C matmul in the kernel and
    # every load is aligned and lane-dense.
    xp = jnp.pad(x, ((0, 0), (1, 1), (1, 1), (0, 0)))
    cols = jnp.concatenate(
        [xp[:, i:i + H, j:j + W, :] for i in range(3) for j in range(3)],
        axis=-1)                                                     # (N,H,W,9C)
    x_cols = cols.reshape(N, R, 9 * C).astype(jnp.bfloat16)

    # Images per grid step: amortize per-step overhead / feed the MXU a larger M
    # when N is large, while keeping >= 2 steps so the batch axis still shards.
    b_rows = max(1, 1024 // R_pad)
    B = max(1, min(b_rows, max(1, N // 2), N))
    N_pad = _round_up(N, B)
    x_cols = jnp.pad(x_cols, ((0, N_pad - N), (0, R_pad - R), (0, 0)))

    sims_p, logits_p = _cabrnet_pallas_call(
        x_cols, w_conv, b_conv, w_addon, b_addon, protot, p_sq, w_last,
        imgs_per_step=B, n_valid_rows=R, eps=eps)
    return sims_p[:N, 0, :num_prototypes], logits_p[:N, 0, :num_classes]


# ---------------------------------------------------------------------------
# CaBRNet model (forward = classifier(extractor(x)))
# ---------------------------------------------------------------------------
class CaBRNetPallas:
    def __init__(self, in_channels=4, backbone_features=32, num_features=32,
                 num_classes=10, protos_per_class=4, seed=0, eps=1e-4):
        self.C_in = in_channels
        self.F = backbone_features
        self.D = num_features
        self.num_classes = num_classes
        self.P = num_classes * protos_per_class
        self.P_pad = _round_up(self.P, LANE)
        self.C_pad = _round_up(num_classes, LANE)
        self.eps = eps

        keys = jax.random.split(jax.random.PRNGKey(seed), 5)
        # backbone: 3x3 conv, PyTorch weight layout (F, C_in, 3, 3)
        w_conv = 0.1 * jax.random.normal(keys[0], (self.F, self.C_in, 3, 3),
                                         jnp.float32)
        b_conv = 0.01 * jax.random.normal(keys[1], (self.F,), jnp.float32)
        # add-on: 1x1 conv, PyTorch layout (D, F, 1, 1)
        w_addon = 0.1 * jax.random.normal(keys[2], (self.D, self.F, 1, 1),
                                          jnp.float32)
        b_addon = 0.01 * jax.random.normal(keys[3], (self.D,), jnp.float32)
        # prototypes: (P, D, 1, 1) in ProtoPNet, stored flat as (P, D)
        prototypes = jax.random.uniform(keys[4], (self.P, self.D), jnp.float32)

        # ---- pack / pad / cast parameters ONCE (lane-dense, MXU-ready) ----
        # conv weight (ki,kj,c) folded into K = 9*C (matches host im2col order)
        self.w_conv = jnp.transpose(w_conv, (2, 3, 1, 0)).reshape(
            9 * self.C_in, self.F).astype(jnp.bfloat16)              # (9C, F)
        self.b_conv = b_conv.reshape(1, self.F).astype(jnp.float32)
        self.w_addon = jnp.transpose(w_addon[:, :, 0, 0], (1, 0)).astype(
            jnp.bfloat16)                                            # (F, D)
        self.b_addon = b_addon.reshape(1, self.D).astype(jnp.float32)
        # prototypes^T (f32 for the distance path), zero-padded to 128 lanes
        protot = prototypes.T.astype(jnp.float32)                    # (D, P)
        self.protot = jnp.pad(protot, ((0, 0), (0, self.P_pad - self.P)))
        self.p_sq = jnp.sum(self.protot ** 2, axis=0, keepdims=True)  # (1,P_pad)
        # last layer: +1 for the prototype's class, -0.5 elsewhere (no bias);
        # zero rows/cols in the padding so padded prototypes never contribute.
        proto_class = jnp.arange(self.P) // protos_per_class
        onehot = proto_class[:, None] == jnp.arange(num_classes)[None, :]
        w_last = jnp.where(onehot, 1.0, -0.5).astype(jnp.float32)    # (P, C)
        self.w_last = jnp.pad(w_last, ((0, self.P_pad - self.P),
                                       (0, self.C_pad - num_classes)))

        self._params = (self.w_conv, self.b_conv, self.w_addon, self.b_addon,
                        self.protot, self.p_sq, self.w_last)

    def _run(self, x_nchw):
        return cabrnet_apply(x_nchw, self._params,
                             num_prototypes=self.P,
                             num_classes=self.num_classes,
                             eps=self.eps)

    # ----- CaBRNet.forward -------------------------------------------------
    def forward(self, x):
        return self._run(x)[1]

    # ----- CaBRNet.similarities --------------------------------------------
    def similarities(self, x):
        return self._run(x)[0]


# TODO(synk): training / projection / explanation / config-loading methods of
# CaBRNet (build_from_config, project, evaluate, explain, ...) are host-side
# orchestration with no Pallas equivalent. CaBRNet.distances() (full per-pixel
# distance maps) is intentionally not exported by the fused kernel.

if __name__ == "__main__":
    key = jax.random.PRNGKey(0)
    x = jax.random.normal(key, (2, 4, 16, 16), jnp.float32)   # NCHW like PyTorch

    model = CaBRNetPallas(in_channels=4, backbone_features=32, num_features=32,
                          num_classes=10, protos_per_class=4, seed=0)

    logits = jax.block_until_ready(model.forward(x))
    sims = jax.block_until_ready(model.similarities(x))

    assert logits.shape == (2, 10), logits.shape
    assert sims.shape == (2, 40), sims.shape
    assert bool(jnp.all(jnp.isfinite(logits)))
    assert bool(jnp.all(jnp.isfinite(sims)))
    print("KERNEL_OK")
</pallas_src>

<mosaic_0001>
module attributes {stable_mosaic.version = 11 : i64} {
  func.func @_cabrnet_fused_kernel(%arg0: i32, %arg1: memref<1x256x36xbf16, #tpu.memory_space<vmem>>, %arg2: memref<36x32xbf16, #tpu.memory_space<vmem>>, %arg3: memref<1x32xf32, #tpu.memory_space<vmem>>, %arg4: memref<32x32xbf16, #tpu.memory_space<vmem>>, %arg5: memref<1x32xf32, #tpu.memory_space<vmem>>, %arg6: memref<32x128xf32, #tpu.memory_space<vmem>>, %arg7: memref<1x128xf32, #tpu.memory_space<vmem>>, %arg8: memref<128x128xf32, #tpu.memory_space<vmem>>, %arg9: memref<1x1x128xf32, #tpu.memory_space<vmem>>, %arg10: memref<1x1x128xf32, #tpu.memory_space<vmem>>) attributes {dimension_semantics = [#tpu.dimension_semantics<parallel>], iteration_bounds = array<i64: 2>, scalar_prefetch = 0 : i64, scratch_operands = 0 : i64, tpu.core_type = #tpu.core_type<tc>, window_params = [{transform_indices = @transform_0, window_bounds = array<i64: 1, 256, 36>}, {pipeline_mode = #tpu.pipeline_mode<synchronous>, transform_indices = @transform_1, window_bounds = array<i64: 36, 32>}, {pipeline_mode = #tpu.pipeline_mode<synchronous>, transform_indices = @transform_2, window_bounds = array<i64: 1, 32>}, {pipeline_mode = #tpu.pipeline_mode<synchronous>, transform_indices = @transform_3, window_bounds = array<i64: 32, 32>}, {pipeline_mode = #tpu.pipeline_mode<synchronous>, transform_indices = @transform_4, window_bounds = array<i64: 1, 32>}, {pipeline_mode = #tpu.pipeline_mode<synchronous>, transform_indices = @transform_5, window_bounds = array<i64: 32, 128>}, {pipeline_mode = #tpu.pipeline_mode<synchronous>, transform_indices = @transform_6, window_bounds = array<i64: 1, 128>}, {pipeline_mode = #tpu.pipeline_mode<synchronous>, transform_indices = @transform_7, window_bounds = array<i64: 128, 128>}, {transform_indices = @transform_8, window_bounds = array<i64: 1, 1, 128>}, {transform_indices = @transform_9, window_bounds = array<i64: 1, 1, 128>}]} {
    %c0 = arith.constant 0 : index
    %c0_0 = arith.constant 0 : index
    %c0_1 = arith.constant 0 : index
    %0 = vector.load %arg1[%c0, %c0_0, %c0_1] : memref<1x256x36xbf16, #tpu.memory_space<vmem>>, vector<1x256x36xbf16>
    %1 = vector.shape_cast %0 : vector<1x256x36xbf16> to vector<256x36xbf16>
    %c0_2 = arith.constant 0 : index
    %c0_3 = arith.constant 0 : index
    %2 = vector.load %arg2[%c0_2, %c0_3] : memref<36x32xbf16, #tpu.memory_space<vmem>>, vector<36x32xbf16>
    %cst = arith.constant dense<0.000000e+00> : vector<256x32xf32>
    %3 = tpu.matmul %1, %2, %cst {dimension_numbers = #tpu.dot_dimension_numbers<[1], [0], [0], [1], [0, 0, 1, 1], [], []>} : vector<256x36xbf16>, vector<36x32xbf16>, vector<256x32xf32> -> vector<256x32xf32>
    %c0_4 = arith.constant 0 : index
    %c0_5 = arith.constant 0 : index
    %4 = vector.load %arg3[%c0_4, %c0_5] : memref<1x32xf32, #tpu.memory_space<vmem>>, vector<1x32xf32>
    %5 = vector.broadcast %4 : vector<1x32xf32> to vector<256x32xf32>
    %6 = arith.addf %3, %5 : vector<256x32xf32>
    %cst_6 = arith.constant 0.000000e+00 : f32
    %7 = vector.broadcast %cst_6 : f32 to vector<256x32xf32>
    %8 = arith.maximumf %6, %7 : vector<256x32xf32>
    %9 = arith.truncf %8 : vector<256x32xf32> to vector<256x32xbf16>
    %c0_7 = arith.constant 0 : index
    %c0_8 = arith.constant 0 : index
    %10 = vector.load %arg4[%c0_7, %c0_8] : memref<32x32xbf16, #tpu.memory_space<vmem>>, vector<32x32xbf16>
    %cst_9 = arith.constant dense<0.000000e+00> : vector<256x32xf32>
    %11 = tpu.matmul %9, %10, %cst_9 {dimension_numbers = #tpu.dot_dimension_numbers<[1], [0], [0], [1], [0, 0, 1, 1], [], []>} : vector<256x32xbf16>, vector<32x32xbf16>, vector<256x32xf32> -> vector<256x32xf32>
    %c0_10 = arith.constant 0 : index
    %c0_11 = arith.constant 0 : index
    %12 = vector.load %arg5[%c0_10, %c0_11] : memref<1x32xf32, #tpu.memory_space<vmem>>, vector<1x32xf32>
    %13 = vector.broadcast %12 : vector<1x32xf32> to vector<256x32xf32>
    %14 = arith.addf %11, %13 : vector<256x32xf32>
    %15 = arith.negf %14 : vector<256x32xf32>
    %16 = math.exp %15 : vector<256x32xf32>
    %cst_12 = arith.constant 1.000000e+00 : f32
    %17 = vector.broadcast %cst_12 : f32 to vector<256x32xf32>
    %18 = arith.addf %17, %16 : vector<256x32xf32>
    %19 = arith.divf %17, %18 : vector<256x32xf32>
    %20 = arith.mulf %19, %19 : vector<256x32xf32>
    %cst_13 = arith.constant dense<0.000000e+00> : vector<256xf32>
    %21 = vector.multi_reduction <add>, %20, %cst_13 [1] : vector<256x32xf32> to vector<256xf32>
    %22 = vector.shape_cast %21 : vector<256xf32> to vector<256x1xf32>
    %c0_14 = arith.constant 0 : index
    %c0_15 = arith.constant 0 : index
    %23 = vector.load %arg6[%c0_14, %c0_15] : memref<32x128xf32, #tpu.memory_space<vmem>>, vector<32x128xf32>
    %cst_16 = arith.constant dense<0.000000e+00> : vector<256x128xf32>
    %24 = tpu.matmul %19, %23, %cst_16 {dimension_numbers = #tpu.dot_dimension_numbers<[1], [0], [0], [1], [0, 0, 1, 1], [], []>} : vector<256x32xf32>, vector<32x128xf32>, vector<256x128xf32> -> vector<256x128xf32>
    %cst_17 = arith.constant 2.000000e+00 : f32
    %25 = vector.broadcast %cst_17 : f32 to vector<256x128xf32>
    %26 = arith.mulf %25, %24 : vector<256x128xf32>
    %27 = vector.broadcast %22 : vector<256x1xf32> to vector<256x128xf32>
    %28 = arith.subf %27, %26 : vector<256x128xf32>
    %c0_18 = arith.constant 0 : index
    %c0_19 = arith.constant 0 : index
    %29 = vector.load %arg7[%c0_18, %c0_19] : memref<1x128xf32, #tpu.memory_space<vmem>>, vector<1x128xf32>
    %30 = vector.broadcast %29 : vector<1x128xf32> to vector<256x128xf32>
    %31 = arith.addf %28, %30 : vector<256x128xf32>
    %cst_20 = arith.constant 0.000000e+00 : f32
    %32 = vector.broadcast %cst_20 : f32 to vector<256x128xf32>
    %33 = arith.maximumf %31, %32 : vector<256x128xf32>
    %cst_21 = arith.constant 9.99999974E-5 : f32
    %34 = vector.broadcast %cst_21 : f32 to vector<256x128xf32>
    %35 = arith.addf %33, %34 : vector<256x128xf32>
    %36 = tpu.reciprocal %35 {approx = true} : vector<256x128xf32> -> vector<256x128xf32>
    %cst_22 = arith.constant 0.999899983 : f32
    %37 = vector.broadcast %cst_22 : f32 to vector<256x128xf32>
    %38 = arith.mulf %37, %36 : vector<256x128xf32>
    %cst_23 = arith.constant 1.000000e+00 : f32
    %39 = vector.broadcast %cst_23 : f32 to vector<256x128xf32>
    %40 = arith.addf %39, %38 : vector<256x128xf32>
    %41 = math.log %40 : vector<256x128xf32>
    %42 = vector.shape_cast %41 : vector<256x128xf32> to vector<1x256x128xf32>
    %cst_24 = arith.constant dense<0xFF800000> : vector<1x128xf32>
    %43 = vector.multi_reduction <maximumf>, %42, %cst_24 [1] : vector<1x256x128xf32> to vector<1x128xf32>
    %44 = vector.shape_cast %43 : vector<1x128xf32> to vector<1x1x128xf32>
    %c0_25 = arith.constant 0 : index
    %c0_26 = arith.constant 0 : index
    %c0_27 = arith.constant 0 : index
    %45 = vector.load %arg9[%c0_25, %c0_26, %c0_27] : memref<1x1x128xf32, #tpu.memory_space<vmem>>, vector<1x1x128xf32>
    tpu.vector_store %arg9[%c0_25, %c0_26, %c0_27], %44 {strides = array<i32>} : memref<1x1x128xf32, #tpu.memory_space<vmem>>, vector<1x1x128xf32>,
    %c0_28 = arith.constant 0 : index
    %c0_29 = arith.constant 0 : index
    %46 = vector.load %arg8[%c0_28, %c0_29] : memref<128x128xf32, #tpu.memory_space<vmem>>, vector<128x128xf32>
    %cst_30 = arith.constant dense<0.000000e+00> : vector<1x128xf32>
    %47 = tpu.matmul %43, %46, %cst_30 {dimension_numbers = #tpu.dot_dimension_numbers<[1], [0], [0], [1], [0, 0, 1, 1], [], []>} : vector<1x128xf32>, vector<128x128xf32>, vector<1x128xf32> -> vector<1x128xf32>
    %48 = vector.shape_cast %47 : vector<1x128xf32> to vector<1x1x128xf32>
    %c0_31 = arith.constant 0 : index
    %c0_32 = arith.constant 0 : index
    %c0_33 = arith.constant 0 : index
    %49 = vector.load %arg10[%c0_31, %c0_32, %c0_33] : memref<1x1x128xf32, #tpu.memory_space<vmem>>, vector<1x1x128xf32>
    tpu.vector_store %arg10[%c0_31, %c0_32, %c0_33], %48 {strides = array<i32>} : memref<1x1x128xf32, #tpu.memory_space<vmem>>, vector<1x1x128xf32>,
    return
  }
  func.func @transform_0(%arg0: i32) -> (i32, i32, i32) {
    %c0_i32 = arith.constant 0 : i32
    %c0_i32_0 = arith.constant 0 : i32
    %c0_i32_1 = arith.constant 0 : i32
    return %arg0, %c0_i32, %c0_i32_0 : i32, i32, i32
  }
  func.func @transform_1(%arg0: i32) -> (i32, i32) {
    %c0_i32 = arith.constant 0 : i32
    %c0_i32_0 = arith.constant 0 : i32
    %c0_i32_1 = arith.constant 0 : i32
    return %c0_i32, %c0_i32_0 : i32, i32
  }
  func.func @transform_2(%arg0: i32) -> (i32, i32) {
    %c0_i32 = arith.constant 0 : i32
    %c0_i32_0 = arith.constant 0 : i32
    %c0_i32_1 = arith.constant 0 : i32
    return %c0_i32, %c0_i32_0 : i32, i32
  }
  func.func @transform_3(%arg0: i32) -> (i32, i32) {
    %c0_i32 = arith.constant 0 : i32
    %c0_i32_0 = arith.constant 0 : i32
    %c0_i32_1 = arith.constant 0 : i32
    return %c0_i32, %c0_i32_0 : i32, i32
  }
  func.func @transform_4(%arg0: i32) -> (i32, i32) {
    %c0_i32 = arith.constant 0 : i32
    %c0_i32_0 = arith.constant 0 : i32
    %c0_i32_1 = arith.constant 0 : i32
    return %c0_i32, %c0_i32_0 : i32, i32
  }
  func.func @transform_5(%arg0: i32) -> (i32, i32) {
    %c0_i32 = arith.constant 0 : i32
    %c0_i32_0 = arith.constant 0 : i32
    %c0_i32_1 = arith.constant 0 : i32
    return %c0_i32, %c0_i32_0 : i32, i32
  }
  func.func @transform_6(%arg0: i32) -> (i32, i32) {
    %c0_i32 = arith.constant 0 : i32
    %c0_i32_0 = arith.constant 0 : i32
    %c0_i32_1 = arith.constant 0 : i32
    return %c0_i32, %c0_i32_0 : i32, i32
  }
  func.func @transform_7(%arg0: i32) -> (i32, i32) {
    %c0_i32 = arith.constant 0 : i32
    %c0_i32_0 = arith.constant 0 : i32
    %c0_i32_1 = arith.constant 0 : i32
    return %c0_i32, %c0_i32_0 : i32, i32
  }
  func.func @transform_8(%arg0: i32) -> (i32, i32, i32) {
    %c0_i32 = arith.constant 0 : i32
    %c0_i32_0 = arith.constant 0 : i32
    %c0_i32_1 = arith.constant 0 : i32
    return %arg0, %c0_i32, %c0_i32_0 : i32, i32, i32
  }
  func.func @transform_9(%arg0: i32) -> (i32, i32, i32) {
    %c0_i32 = arith.constant 0 : i32
    %c0_i32_0 = arith.constant 0 : i32
    %c0_i32_1 = arith.constant 0 : i32
    return %arg0, %c0_i32, %c0_i32_0 : i32, i32, i32
  }
}

</mosaic_0001>

<llo_original>
// kernel: cabrnet_apply.1
$region0: #{cabrnet_apply.1}
  #allocation0 [shape = 'u32[]', space=smem, size = 0x4, offset = 0x4, fixed_abs, tag = 'smem constant byte address 0x4 - core index']
  #allocation1 [shape = 'u32[144,128]{1,0:T(1,128)}', space=vmem, size = 0x12000, scoped, tag = 'internal scratch']
  %s0 = inlined_call_operand.vmem [shape: bf16[2,256,36], index: 0, kind: input, shape index: {}]
  %s1 = inlined_call_operand.vmem [shape: bf16[36,32], index: 1, kind: input, shape index: {}]
  %s2 = inlined_call_operand.vmem [shape: f32[1,32], index: 2, kind: input, shape index: {}]
  %s3 = inlined_call_operand.vmem [shape: bf16[32,32], index: 3, kind: input, shape index: {}]
  %s4 = inlined_call_operand.vmem [shape: f32[1,32], index: 4, kind: input, shape index: {}]
  %s5 = inlined_call_operand.vmem [shape: f32[32,128], index: 5, kind: input, shape index: {}]
  %s6 = inlined_call_operand.vmem [shape: f32[1,128], index: 6, kind: input, shape index: {}]
  %s7 = inlined_call_operand.vmem [shape: f32[128,128], index: 7, kind: input, shape index: {}]
  %s8 = inlined_call_operand.hbm [shape: f32[2,1,128], index: 8, kind: output, shape index: {0}]
  %s9 = inlined_call_operand.hbm [shape: f32[2,1,128], index: 9, kind: output, shape index: {1}]
  %10 = xla_tuple %s8, %s9
  %s11 = sld [smem:[#allocation0]]
  $region73: #{cabrnet_apply.1} parent=0
    _
  %s13 = ssub.s32 1, %s11
  %s14 = scalar_select 0, %s13, %s11
  $region1: #{cabrnet_apply.1} parent=0
    #allocation2 [shape = 'u8[1024]{0}', space=vmem, size = 0x400, scoped, tag = 'output window, operand 0']
    #allocation3 [shape = 's32[2]{0}', space=sflag, size = 0x8, scoped, tag = 'scoped memory for cabrnet_apply.1']
    #allocation4 [shape = 'u8[1024]{0}', space=vmem, size = 0x400, scoped, tag = 'output window, operand 1']
    #allocation5 [shape = 's32[2]{0}', space=sflag, size = 0x8, scoped, tag = 'scoped memory for cabrnet_apply.1']
    %15 = vsyncpa [#allocation3], 0
    %s16 = scalar_lea.sflag [#allocation3], 1
    %17 = vsyncpa %s16, 0
    %18 = vsyncpa [#allocation5], 0
    %s19 = scalar_lea.sflag [#allocation5], 1
    %20 = vsyncpa %s19, 0
    loop: start=0, step=1, limit=4
    $region2: #{cabrnet_apply.1} parent=1 // loop_pre_header
      _
    $region3: #{cabrnet_apply.1} parent=1 // loop_header
      %s22 = sphi 0, %s26
      %p23 = scmp.ge.s32.totalorder %s22, 4
      %s32 = sphi 0, %s34
      %s35 = sphi 0, %s32
      %s36 = sphi 0, %s35
      %s52 = sphi 0, %s36
      %s56 = sphi 0, %s56
      %s58 = sphi 0, %s56
      %s59 = sphi 0, %s58
      %s73 = sphi 0, %s59
      %s77 = sphi 0, %s77
      %s79 = sphi 0, %s77
      %s80 = sphi 0, %s79
      %s94 = sphi 0, %s80
      %s98 = sphi 0, %s98
      %s100 = sphi 0, %s98
      %s101 = sphi 0, %s100
      %s115 = sphi 0, %s101
      %s119 = sphi 0, %s119
      %s121 = sphi 0, %s119
      %s122 = sphi 0, %s121
      %s136 = sphi 0, %s122
      %s140 = sphi 0, %s140
      %s142 = sphi 0, %s140
      %s143 = sphi 0, %s142
      %s157 = sphi 0, %s143
      %s161 = sphi 0, %s161
      %s163 = sphi 0, %s161
      %s164 = sphi 0, %s163
      %s178 = sphi 0, %s164
      %s182 = sphi 0, %s182
      %s184 = sphi 0, %s182
      %s185 = sphi 0, %s184
      %s199 = sphi 0, %s185
      %s205 = sphi 0, %s207
      %s208 = sphi 0, %s205
      %s209 = sphi 0, %s208
      %s225 = sphi 0, %s209
      %s231 = sphi 0, %s233
      %s234 = sphi 0, %s231
      %s235 = sphi 0, %s234
      %s251 = sphi 0, %s235
    $region4: #{cabrnet_apply.1} parent=1 // loop_header_branch
      %25 = sbr.rel (%p23) target = $region8
    $region5: #{cabrnet_apply.1} parent=1 // loop_body
      %s27 = ssub.s32 %s22, 1
      %s28 = ssub.s32 %s22, 2
      %s29 = sadd.s32 %s22, 1
      %s30 = ssub.s32 %s22, %s29
      %p31 = scmp.eq.s32.totalorder %s30, 0
      %s33 = sadd.s32 %s32, 1
      %s34 = scalar_select %p31, %s32, %s33
      %p37 = pneg %p31
      %p38 = scmp.eq.s32.totalorder %s22, 1
      %p39 = por %p37, %p38
      %p40 = scmp.ne.s32.totalorder %s32, %s35
      %p41 = scmp.eq.s32.totalorder %s22, 0
      %p42 = por %p40, %p41
      %p43 = scmp.ne.s32.totalorder %s32, %s35
      %p44 = scmp.eq.s32.totalorder %s27, 1
      %p45 = por %p43, %p44
      %p46 = scmp.ne.s32.totalorder %s35, %s36
      %p47 = scmp.eq.s32.totalorder %s27, 0
      %p48 = por %p46, %p47
      %p49 = scmp.ne.s32.totalorder %s35, %s36
      %p50 = scmp.eq.s32.totalorder %s28, 1
      %p51 = por %p49, %p50
      %p53 = scmp.ne.s32.totalorder %s36, %s52
      %p54 = scmp.eq.s32.totalorder %s28, 0
      %p55 = por %p53, %p54
      %s57 = sadd.s32 %s56, 1
      %p60 = scmp.eq.s32.totalorder %s22, 1
      %p61 = scmp.ne.s32.totalorder %s56, %s58
      %p62 = scmp.eq.s32.totalorder %s22, 0
      %p63 = por %p61, %p62
      %p64 = scmp.ne.s32.totalorder %s56, %s58
      %p65 = scmp.eq.s32.totalorder %s27, 1
      %p66 = por %p64, %p65
      %p67 = scmp.ne.s32.totalorder %s58, %s59
      %p68 = scmp.eq.s32.totalorder %s27, 0
      %p69 = por %p67, %p68
      %p70 = scmp.ne.s32.totalorder %s58, %s59
      %p71 = scmp.eq.s32.totalorder %s28, 1
      %p72 = por %p70, %p71
      %p74 = scmp.ne.s32.totalorder %s59, %s73
      %p75 = scmp.eq.s32.totalorder %s28, 0
      %p76 = por %p74, %p75
      %s78 = sadd.s32 %s77, 1
      %p81 = scmp.eq.s32.totalorder %s22, 1
      %p82 = scmp.ne.s32.totalorder %s77, %s79
      %p83 = scmp.eq.s32.totalorder %s22, 0
      %p84 = por %p82, %p83
      %p85 = scmp.ne.s32.totalorder %s77, %s79
      %p86 = scmp.eq.s32.totalorder %s27, 1
      %p87 = por %p85, %p86
      %p88 = scmp.ne.s32.totalorder %s79, %s80
      %p89 = scmp.eq.s32.totalorder %s27, 0
      %p90 = por %p88, %p89
      %p91 = scmp.ne.s32.totalorder %s79, %s80
      %p92 = scmp.eq.s32.totalorder %s28, 1
      %p93 = por %p91, %p92
      %p95 = scmp.ne.s32.totalorder %s80, %s94
      %p96 = scmp.eq.s32.totalorder %s28, 0
      %p97 = por %p95, %p96
      %s99 = sadd.s32 %s98, 1
      %p102 = scmp.eq.s32.totalorder %s22, 1
      %p103 = scmp.ne.s32.totalorder %s98, %s100
      %p104 = scmp.eq.s32.totalorder %s22, 0
      %p105 = por %p103, %p104
      %p106 = scmp.ne.s32.totalorder %s98, %s100
      %p107 = scmp.eq.s32.totalorder %s27, 1
      %p108 = por %p106, %p107
      %p109 = scmp.ne.s32.totalorder %s100, %s101
      %p110 = scmp.eq.s32.totalorder %s27, 0
      %p111 = por %p109, %p110
      %p112 = scmp.ne.s32.totalorder %s100, %s101
      %p113 = scmp.eq.s32.totalorder %s28, 1
      %p114 = por %p112, %p113
      %p116 = scmp.ne.s32.totalorder %s101, %s115
      %p117 = scmp.eq.s32.totalorder %s28, 0
      %p118 = por %p116, %p117
      %s120 = sadd.s32 %s119, 1
      %p123 = scmp.eq.s32.totalorder %s22, 1
      %p124 = scmp.ne.s32.totalorder %s119, %s121
      %p125 = scmp.eq.s32.totalorder %s22, 0
      %p126 = por %p124, %p125
      %p127 = scmp.ne.s32.totalorder %s119, %s121
      %p128 = scmp.eq.s32.totalorder %s27, 1
      %p129 = por %p127, %p128
      %p130 = scmp.ne.s32.totalorder %s121, %s122
      %p131 = scmp.eq.s32.totalorder %s27, 0
      %p132 = por %p130, %p131
      %p133 = scmp.ne.s32.totalorder %s121, %s122
      %p134 = scmp.eq.s32.totalorder %s28, 1
      %p135 = por %p133, %p134
      %p137 = scmp.ne.s32.totalorder %s122, %s136
      %p138 = scmp.eq.s32.totalorder %s28, 0
      %p139 = por %p137, %p138
      %s141 = sadd.s32 %s140, 1
      %p144 = scmp.eq.s32.totalorder %s22, 1
      %p145 = scmp.ne.s32.totalorder %s140, %s142
      %p146 = scmp.eq.s32.totalorder %s22, 0
      %p147 = por %p145, %p146
      %p148 = scmp.ne.s32.totalorder %s140, %s142
      %p149 = scmp.eq.s32.totalorder %s27, 1
      %p150 = por %p148, %p149
      %p151 = scmp.ne.s32.totalorder %s142, %s143
      %p152 = scmp.eq.s32.totalorder %s27, 0
      %p153 = por %p151, %p152
      %p154 = scmp.ne.s32.totalorder %s142, %s143
      %p155 = scmp.eq.s32.totalorder %s28, 1
      %p156 = por %p154, %p155
      %p158 = scmp.ne.s32.totalorder %s143, %s157
      %p159 = scmp.eq.s32.totalorder %s28, 0
      %p160 = por %p158, %p159
      %s162 = sadd.s32 %s161, 1
      %p165 = scmp.eq.s32.totalorder %s22, 1
      %p166 = scmp.ne.s32.totalorder %s161, %s163
      %p167 = scmp.eq.s32.totalorder %s22, 0
      %p168 = por %p166, %p167
      %p169 = scmp.ne.s32.totalorder %s161, %s163
      %p170 = scmp.eq.s32.totalorder %s27, 1
      %p171 = por %p169, %p170
      %p172 = scmp.ne.s32.totalorder %s163, %s164
      %p173 = scmp.eq.s32.totalorder %s27, 0
      %p174 = por %p172, %p173
      %p175 = scmp.ne.s32.totalorder %s163, %s164
      %p176 = scmp.eq.s32.totalorder %s28, 1
      %p177 = por %p175, %p176
      %p179 = scmp.ne.s32.totalorder %s164, %s178
      %p180 = scmp.eq.s32.totalorder %s28, 0
      %p181 = por %p179, %p180
      %s183 = sadd.s32 %s182, 1
      %p186 = scmp.eq.s32.totalorder %s22, 1
      %p187 = scmp.ne.s32.totalorder %s182, %s184
      %p188 = scmp.eq.s32.totalorder %s22, 0
      %p189 = por %p187, %p188
      %p190 = scmp.ne.s32.totalorder %s182, %s184
      %p191 = scmp.eq.s32.totalorder %s27, 1
      %p192 = por %p190, %p191
      %p193 = scmp.ne.s32.totalorder %s184, %s185
      %p194 = scmp.eq.s32.totalorder %s27, 0
      %p195 = por %p193, %p194
      %p196 = scmp.ne.s32.totalorder %s184, %s185
      %p197 = scmp.eq.s32.totalorder %s28, 1
      %p198 = por %p196, %p197
      %p200 = scmp.ne.s32.totalorder %s185, %s199
      %p201 = scmp.eq.s32.totalorder %s28, 0
      %p202 = por %p200, %p201
      %s203 = ssub.s32 %s22, %s29
      %p204 = scmp.eq.s32.totalorder %s203, 0
      %s206 = sadd.s32 %s205, 1
      %s207 = scalar_select %p204, %s205, %s206
      %p210 = pneg %p204
      %p211 = scmp.eq.s32.totalorder %s22, 1
      %p212 = por %p210, %p211
      %p213 = scmp.ne.s32.totalorder %s205, %s208
      %p214 = scmp.eq.s32.totalorder %s22, 0
      %p215 = por %p213, %p214
      %p216 = scmp.ne.s32.totalorder %s205, %s208
      %p217 = scmp.eq.s32.totalorder %s27, 1
      %p218 = por %p216, %p217
      %p219 = scmp.ne.s32.totalorder %s208, %s209
      %p220 = scmp.eq.s32.totalorder %s27, 0
      %p221 = por %p219, %p220
      %p222 = scmp.ne.s32.totalorder %s208, %s209
      %p223 = scmp.eq.s32.totalorder %s28, 1
      %p224 = por %p222, %p223
      %p226 = scmp.ne.s32.totalorder %s209, %s225
      %p227 = scmp.eq.s32.totalorder %s28, 0
      %p228 = por %p226, %p227
      %s229 = ssub.s32 %s22, %s29
      %p230 = scmp.eq.s32.totalorder %s229, 0
      %s232 = sadd.s32 %s231, 1
      %s233 = scalar_select %p230, %s231, %s232
      %p236 = pneg %p230
      %p237 = scmp.eq.s32.totalorder %s22, 1
      %p238 = por %p236, %p237
      %p239 = scmp.ne.s32.totalorder %s231, %s234
      %p240 = scmp.eq.s32.totalorder %s22, 0
      %p241 = por %p239, %p240
      %p242 = scmp.ne.s32.totalorder %s231, %s234
      %p243 = scmp.eq.s32.totalorder %s27, 1
      %p244 = por %p242, %p243
      %p245 = scmp.ne.s32.totalorder %s234, %s235
      %p246 = scmp.eq.s32.totalorder %s27, 0
      %p247 = por %p245, %p246
      %p248 = scmp.ne.s32.totalorder %s234, %s235
      %p249 = scmp.eq.s32.totalorder %s28, 1
      %p250 = por %p248, %p249
      %p252 = scmp.ne.s32.totalorder %s235, %s251
      %p253 = scmp.eq.s32.totalorder %s28, 0
      %p254 = por %p252, %p253
      %p255 = scmp.le.s32.totalorder 1, %s22
      %p256 = scmp.lt.s32.totalorder %s22, 3
      %p257 = pnand %p255, %p256
      %p258 = pneg %p257
      // Predicated region
      $region9: #{cabrnet_apply.1} parent=5 // pred_check
        _
      $region10: #{cabrnet_apply.1} parent=5 // pred_check_branch
        %260 = sbr.rel (%p257) target = $region12
      $region11: #{cabrnet_apply.1} parent=5 // pred_region
        %s261 = ssub.s32 %s22, 1
        // Predicated region
        $region13: #{cabrnet_apply.1} parent=11 // pred_check
          %p262 = pneg %p69
        $region14: #{cabrnet_apply.1} parent=11 // pred_check_branch
          %264 = sbr.rel (%p262) target = $region16
        $region15: #{cabrnet_apply.1} parent=11 // pred_region
          _
        $region16: #{cabrnet_apply.1} parent=11 // pred_fallthru
          _
        // Predicated region
        $region17: #{cabrnet_apply.1} parent=11 // pred_check
          %p265 = pneg %p90
        $region18: #{cabrnet_apply.1} parent=11 // pred_check_branch
          %267 = sbr.rel (%p265) target = $region20
        $region19: #{cabrnet_apply.1} parent=11 // pred_region
          _
        $region20: #{cabrnet_apply.1} parent=11 // pred_fallthru
          _
        // Predicated region
        $region21: #{cabrnet_apply.1} parent=11 // pred_check
          %p268 = pneg %p111
        $region22: #{cabrnet_apply.1} parent=11 // pred_check_branch
          %270 = sbr.rel (%p268) target = $region24
        $region23: #{cabrnet_apply.1} parent=11 // pred_region
          _
        $region24: #{cabrnet_apply.1} parent=11 // pred_fallthru
          _
        // Predicated region
        $region25: #{cabrnet_apply.1} parent=11 // pred_check
          %p271 = pneg %p132
        $region26: #{cabrnet_apply.1} parent=11 // pred_check_branch
          %273 = sbr.rel (%p271) target = $region28
        $region27: #{cabrnet_apply.1} parent=11 // pred_region
          _
        $region28: #{cabrnet_apply.1} parent=11 // pred_fallthru
          _
        // Predicated region
        $region29: #{cabrnet_apply.1} parent=11 // pred_check
          %p274 = pneg %p153
        $region30: #{cabrnet_apply.1} parent=11 // pred_check_branch
          %276 = sbr.rel (%p274) target = $region32
        $region31: #{cabrnet_apply.1} parent=11 // pred_region
          _
        $region32: #{cabrnet_apply.1} parent=11 // pred_fallthru
          _
        // Predicated region
        $region33: #{cabrnet_apply.1} parent=11 // pred_check
          %p277 = pneg %p174
        $region34: #{cabrnet_apply.1} parent=11 // pred_check_branch
          %279 = sbr.rel (%p277) target = $region36
        $region35: #{cabrnet_apply.1} parent=11 // pred_region
          _
        $region36: #{cabrnet_apply.1} parent=11 // pred_fallthru
          _
        // Predicated region
        $region37: #{cabrnet_apply.1} parent=11 // pred_check
          %p280 = pneg %p195
        $region38: #{cabrnet_apply.1} parent=11 // pred_check_branch
          %282 = sbr.rel (%p280) target = $region40
        $region39: #{cabrnet_apply.1} parent=11 // pred_region
          _
        $region40: #{cabrnet_apply.1} parent=11 // pred_fallthru
          _
      $region12: #{cabrnet_apply.1} parent=5 // pred_fallthru
        _
      %p283 = scmp.lt.s32.totalorder %s22, 2
      // Predicated region
      $region41: #{cabrnet_apply.1} parent=5 // pred_check
        %p284 = pneg %p283
      $region42: #{cabrnet_apply.1} parent=5 // pred_check_branch
        %286 = sbr.rel (%p284) target = $region44
      $region43: #{cabrnet_apply.1} parent=5 // pred_region
        // Predicated region
        $region45: #{cabrnet_apply.1} parent=43 // pred_check
          %p287 = pneg %p42
        $region46: #{cabrnet_apply.1} parent=43 // pred_check_branch
          %289 = sbr.rel (%p287) target = $region48
        $region47: #{cabrnet_apply.1} parent=43 // pred_region
          %p290 = scmp.lt.s32.totalorder %s22, 1
          %s291 = scalar_select %p290, %s22, 1
          %s292 = smul.addr %s291, 32
          %s293 = smul.addr %s292, 4
          %s294 = scalar_lea.vmem %s0, %s293
        $region48: #{cabrnet_apply.1} parent=43 // pred_fallthru
          _
      $region44: #{cabrnet_apply.1} parent=5 // pred_fallthru
        _
      %p295 = scmp.le.s32.totalorder 1, %s22
      %p296 = scmp.lt.s32.totalorder %s22, 3
      %p297 = pnand %p295, %p296
      %p298 = pneg %p297
      // Predicated region
      $region49: #{cabrnet_apply.1} parent=5 // pred_check
        _
      $region50: #{cabrnet_apply.1} parent=5 // pred_check_branch
        %300 = sbr.rel (%p297) target = $region52
      $region51: #{cabrnet_apply.1} parent=5 // pred_region
        %s301 = ssub.s32 %s22, 1
        %p302 = scmp.lt.s32.totalorder %s27, 1
        %s303 = scalar_select %p302, %s27, 1
        %s304 = smul.addr %s303, 32
        %s305 = smul.addr %s304, 4
        %s306 = scalar_lea.vmem %s0, %s305
        %p307 = pneg %p48
        %p308 = pneg %p45
        %p309 = pneg %p69
        %p310 = pneg %p66
        %p311 = pneg %p90
        %p312 = pneg %p87
        %p313 = pneg %p111
        %p314 = pneg %p108
        %p315 = pneg %p132
        %p316 = pneg %p129
        %p317 = pneg %p153
        %p318 = pneg %p150
        %p319 = pneg %p174
        %p320 = pneg %p171
        %p321 = pneg %p195
        %p322 = pneg %p192
        %p323 = pneg %p221
        %p324 = pneg %p218
        %s325 = sand.u32 %s208, 1
        %s326 = scalar_lea.sflag [#allocation3], %s325
        %s327 = sand.u32 %s208, 1
        %s328 = scalar_lea.vmem [#allocation2], %s327
        %p329 = pneg %p247
        %p330 = pneg %p244
        %s331 = sand.u32 %s234, 1
        %s332 = scalar_lea.sflag [#allocation5], %s331
        %s333 = sand.u32 %s234, 1
        %s334 = scalar_lea.vmem [#allocation4], %s333
        %p335 = scmp.lt.s32.totalorder %s27, 1
        %s336 = scalar_select %p335, %s27, 1
        %s337 = smul.addr %s336, 32
        %s338 = smul.addr %s337, 4
        %s339 = scalar_lea.vmem %s0, %s338
        %v341 = vld [vmem:[%s339] sm:$0xf]
        %v342 = vld [vmem:[%s339 + $0x4] sm:$0xf]
        %v343 = vld [vmem:[%s339 + $0x8] sm:$0xf]
        %v344 = vld [vmem:[%s339 + $0xc] sm:$0xf]
        %v345 = vld [vmem:[%s339 + $0x10] sm:$0xf]
        %v346 = vld [vmem:[%s339 + $0x14] sm:$0xf]
        %v347 = vld [vmem:[%s339 + $0x18] sm:$0xf]
        %v348 = vld [vmem:[%s339 + $0x1c] sm:$0xf]
        %v349 = vld [vmem:[%s339 + $0x20] sm:$0xf]
        %v350 = vld [vmem:[%s339 + $0x24] sm:$0xf]
        %v351 = vld [vmem:[%s339 + $0x28] sm:$0xf]
        %v352 = vld [vmem:[%s339 + $0x2c] sm:$0xf]
        %v353 = vld [vmem:[%s339 + $0x30] sm:$0xf]
        %v354 = vld [vmem:[%s339 + $0x34] sm:$0xf]
        %v355 = vld [vmem:[%s339 + $0x38] sm:$0xf]
        %v356 = vld [vmem:[%s339 + $0x3c] sm:$0xf]
        %v357 = vld [vmem:[%s339 + $0x40] sm:$0xf]
        %v358 = vld [vmem:[%s339 + $0x44] sm:$0xf]
        %v359 = vld [vmem:[%s339 + $0x48] sm:$0xf]
        %v360 = vld [vmem:[%s339 + $0x4c] sm:$0xf]
        %v361 = vld [vmem:[%s339 + $0x50] sm:$0xf]
        %v362 = vld [vmem:[%s339 + $0x54] sm:$0xf]
        %v363 = vld [vmem:[%s339 + $0x58] sm:$0xf]
        %v364 = vld [vmem:[%s339 + $0x5c] sm:$0xf]
        %v365 = vld [vmem:[%s339 + $0x60] sm:$0xf]
        %v366 = vld [vmem:[%s339 + $0x64] sm:$0xf]
        %v367 = vld [vmem:[%s339 + $0x68] sm:$0xf]
        %v368 = vld [vmem:[%s339 + $0x6c] sm:$0xf]
        %v369 = vld [vmem:[%s339 + $0x70] sm:$0xf]
        %v370 = vld [vmem:[%s339 + $0x74] sm:$0xf]
        %v371 = vld [vmem:[%s339 + $0x78] sm:$0xf]
        %v372 = vld [vmem:[%s339 + $0x7c] sm:$0xf]
        %v373 = vld [vmem:[%s1] sm:$0xf]
        %v374 = vld [vmem:[%s1 + $0x4] sm:$0xf]
        %v375 = vld [vmem:[%s1 + $0x8] sm:$0xf]
        %v376 = vld [vmem:[%s1 + $0xc] sm:$0xf]
        %v377 = vld [vmem:[%s1 + $0x10] sm:$0x3]
        %v378 = vld [vmem:[%s2] sm:$0x1]
        %v380 = vlaneseq
        %v381 = vshrl.u32 %v380, 7
        %v382 = vsub.s32 0, %v381
        %v383 = vrot.slane %v378, %v382
        %v417 = vunpack.c.l.b16 %v341
        %v418 = vunpack.c.l.b16 %v342
        %v419 = vunpack.c.l.b16 %v343
        %v420 = vunpack.c.l.b16 %v344
        %v421 = vunpack.c.l.b16 %v345
        %v422 = vunpack.c.l.b16 %v346
        %v423 = vunpack.c.l.b16 %v347
        %v424 = vunpack.c.l.b16 %v348
        %v425 = vunpack.c.l.b16 %v349
        %v426 = vunpack.c.l.b16 %v350
        %v427 = vunpack.c.l.b16 %v351
        %v428 = vunpack.c.l.b16 %v352
        %v429 = vunpack.c.l.b16 %v353
        %v430 = vunpack.c.l.b16 %v354
        %v431 = vunpack.c.l.b16 %v355
        %v432 = vunpack.c.l.b16 %v356
        %v433 = vunpack.c.l.b16 %v357
        %v434 = vunpack.c.l.b16 %v358
        %v435 = vunpack.c.l.b16 %v359
        %v436 = vunpack.c.l.b16 %v360
        %v437 = vunpack.c.l.b16 %v361
        %v438 = vunpack.c.l.b16 %v362
        %v439 = vunpack.c.l.b16 %v363
        %v440 = vunpack.c.l.b16 %v364
        %v441 = vunpack.c.l.b16 %v365
        %v442 = vunpack.c.l.b16 %v366
        %v443 = vunpack.c.l.b16 %v367
        %v444 = vunpack.c.l.b16 %v368
        %v445 = vunpack.c.l.b16 %v369
        %v446 = vunpack.c.l.b16 %v370
        %v447 = vunpack.c.l.b16 %v371
        %v448 = vunpack.c.l.b16 %v372
        %v449 = vpack.c.b16 %v418, %v417
        %v450 = vpack.c.b16 %v420, %v419
        %v451 = vpack.c.b16 %v422, %v421
        %v452 = vpack.c.b16 %v424, %v423
        %v453 = vpack.c.b16 %v426, %v425
        %v454 = vpack.c.b16 %v428, %v427
        %v455 = vpack.c.b16 %v430, %v429
        %v456 = vpack.c.b16 %v432, %v431
        %v457 = vpack.c.b16 %v434, %v433
        %v458 = vpack.c.b16 %v436, %v435
        %v459 = vpack.c.b16 %v438, %v437
        %v460 = vpack.c.b16 %v440, %v439
        %v461 = vpack.c.b16 %v442, %v441
        %v462 = vpack.c.b16 %v444, %v443
        %v463 = vpack.c.b16 %v446, %v445
        %v464 = vpack.c.b16 %v448, %v447
        %v470 = vunpack.c.l.b16 %v373
        %v471 = vunpack.c.l.b16 %v374
        %v472 = vunpack.c.l.b16 %v375
        %v473 = vunpack.c.l.b16 %v376
        %v474 = vunpack.c.l.b16 %v377
        %v475 = vpack.c.b16 %v471, %v470
        %v476 = vpack.c.b16 %v473, %v472
        %v477 = vpack.c.b16 %v474, %v474
        %vm480 = vcmask 293888
        %v482 = vsel %vm480, %v449, 0
        %v485 = vsel %vm480, %v450, 0
        %v488 = vsel %vm480, %v451, 0
        %v491 = vsel %vm480, %v452, 0
        %v494 = vsel %vm480, %v453, 0
        %v497 = vsel %vm480, %v454, 0
        %v500 = vsel %vm480, %v455, 0
        %v503 = vsel %vm480, %v456, 0
        %v506 = vsel %vm480, %v457, 0
        %v509 = vsel %vm480, %v458, 0
        %v512 = vsel %vm480, %v459, 0
        %v515 = vsel %vm480, %v460, 0
        %v518 = vsel %vm480, %v461, 0
        %v521 = vsel %vm480, %v462, 0
        %v524 = vsel %vm480, %v463, 0
        %v527 = vsel %vm480, %v464, 0
        %vm529 = vcmask 1041408
        %v531 = vsel %vm529, %v477, 0
        %533 = vmatprep.subr.bf16.mxu0 0
        %534 = vmatpush1.bf16.msra.mxu0 0
        %535 = vmatprep.subr.bf16.mxu0 0
        %536 = vmatpush1.bf16.msra.mxu0 0
        %537 = vmatprep.subr.bf16.mxu0 0
        %538 = vmatpush1.bf16.msra.mxu0 0
        %539 = vmatprep.subr.bf16.mxu0 0
        %540 = vmatpush1.bf16.msra.mxu0 0
        %541 = vmatprep.subr.bf16.mxu0 0
        %542 = vmatpush1.bf16.msra.mxu0 0
        %543 = vmatprep.subr.bf16.mxu0 0
        %544 = vmatpush1.bf16.msra.mxu0 %v531
        %545 = vmatprep.subr.bf16.mxu0 0
        %546 = vmatpush1.bf16.msra.mxu0 %v476
        %547 = vmatprep.subr.bf16.mxu0 0
        %548 = vmatpush1.bf16.msra.mxu0 %v475
        %549 = vmatprep.subr.bf16.mxu0 0
        %550 = vmatpush2.bf16.msra.mxu0 0
        %551 = vmatprep.subr.bf16.mxu0 0
        %552 = vmatpush2.bf16.msra.mxu0 0
        %553 = vmatprep.subr.bf16.mxu0 0
        %554 = vmatpush2.bf16.msra.mxu0 0
        %555 = vmatprep.subr.bf16.mxu0 0
        %556 = vmatpush2.bf16.msra.mxu0 0
        %557 = vmatprep.subr.bf16.mxu0 0
        %558 = vmatpush2.bf16.msra.mxu0 0
        %559 = vmatprep.subr.bf16.mxu0 0
        %560 = vmatpush2.bf16.msra.mxu0 0
        %561 = vmatprep.subr.bf16.mxu0 0
        %562 = vmatpush2.bf16.msra.mxu0 0
        %563 = vmatprep.subr.bf16.mxu0 0
        %564 = vmatpush2.bf16.msra.mxu0 0
        %565 = vmatprep.mubr.bf16.mxu0 0
        %566 = vmatmul.mubr.bf16.gmra.mxu0 %v482
        %v567 = vpop.f32.mrf.mxu0
        %v568 = vadd.f32 %v383, %v567
        %v569 = vpop.f32.mrf.mxu0
        %v570 = vpop.f32.mrf.mxu0
        %v571 = vadd.f32 %v383, %v570
        %v572 = vpop.f32.mrf.mxu0
        %573 = vmatprep.mubr.bf16.mxu0 0
        %574 = vmatmul.mubr.bf16.gmra.mxu0 %v485
        %v575 = vpop.f32.mrf.mxu0
        %v576 = vadd.f32 %v383, %v575
        %v577 = vpop.f32.mrf.mxu0
        %v578 = vpop.f32.mrf.mxu0
        %v579 = vadd.f32 %v383, %v578
        %v580 = vpop.f32.mrf.mxu0
        %581 = vmatprep.mubr.bf16.mxu0 0
        %582 = vmatmul.mubr.bf16.gmra.mxu0 %v488
        %v583 = vpop.f32.mrf.mxu0
        %v584 = vadd.f32 %v383, %v583
        %v585 = vpop.f32.mrf.mxu0
        %v586 = vpop.f32.mrf.mxu0
        %v587 = vadd.f32 %v383, %v586
        %v588 = vpop.f32.mrf.mxu0
        %589 = vmatprep.mubr.bf16.mxu0 0
        %590 = vmatmul.mubr.bf16.gmra.mxu0 %v491
        %v591 = vpop.f32.mrf.mxu0
        %v592 = vadd.f32 %v383, %v591
        %v593 = vpop.f32.mrf.mxu0
        %v594 = vpop.f32.mrf.mxu0
        %v595 = vadd.f32 %v383, %v594
        %v596 = vpop.f32.mrf.mxu0
        %597 = vmatprep.mubr.bf16.mxu0 0
        %598 = vmatmul.mubr.bf16.gmra.mxu0 %v494
        %v599 = vpop.f32.mrf.mxu0
        %v600 = vadd.f32 %v383, %v599
        %v601 = vpop.f32.mrf.mxu0
        %v602 = vpop.f32.mrf.mxu0
        %v603 = vadd.f32 %v383, %v602
        %v604 = vpop.f32.mrf.mxu0
        %605 = vmatprep.mubr.bf16.mxu0 0
        %606 = vmatmul.mubr.bf16.gmra.mxu0 %v497
        %v607 = vpop.f32.mrf.mxu0
        %v608 = vadd.f32 %v383, %v607
        %v609 = vpop.f32.mrf.mxu0
        %v610 = vpop.f32.mrf.mxu0
        %v611 = vadd.f32 %v383, %v610
        %v612 = vpop.f32.mrf.mxu0
        %613 = vmatprep.mubr.bf16.mxu0 0
        %614 = vmatmul.mubr.bf16.gmra.mxu0 %v500
        %v615 = vpop.f32.mrf.mxu0
        %v616 = vadd.f32 %v383, %v615
        %v617 = vpop.f32.mrf.mxu0
        %v618 = vpop.f32.mrf.mxu0
        %v619 = vadd.f32 %v383, %v618
        %v620 = vpop.f32.mrf.mxu0
        %621 = vmatprep.mubr.bf16.mxu0 0
        %622 = vmatmul.mubr.bf16.gmra.mxu0 %v503
        %v623 = vpop.f32.mrf.mxu0
        %v624 = vadd.f32 %v383, %v623
        %v625 = vpop.f32.mrf.mxu0
        %v626 = vpop.f32.mrf.mxu0
        %v627 = vadd.f32 %v383, %v626
        %v628 = vpop.f32.mrf.mxu0
        %629 = vmatprep.mubr.bf16.mxu0 0
        %630 = vmatmul.mubr.bf16.gmra.mxu0 %v506
        %v631 = vpop.f32.mrf.mxu0
        %v632 = vadd.f32 %v383, %v631
        %v633 = vpop.f32.mrf.mxu0
        %v634 = vpop.f32.mrf.mxu0
        %v635 = vadd.f32 %v383, %v634
        %v636 = vpop.f32.mrf.mxu0
        %637 = vmatprep.mubr.bf16.mxu0 0
        %638 = vmatmul.mubr.bf16.gmra.mxu0 %v509
        %v639 = vpop.f32.mrf.mxu0
        %v640 = vadd.f32 %v383, %v639
        %v641 = vpop.f32.mrf.mxu0
        %v642 = vpop.f32.mrf.mxu0
        %v643 = vadd.f32 %v383, %v642
        %v644 = vpop.f32.mrf.mxu0
        %645 = vmatprep.mubr.bf16.mxu0 0
        %646 = vmatmul.mubr.bf16.gmra.mxu0 %v512
        %v647 = vpop.f32.mrf.mxu0
        %v648 = vadd.f32 %v383, %v647
        %v649 = vpop.f32.mrf.mxu0
        %v650 = vpop.f32.mrf.mxu0
        %v651 = vadd.f32 %v383, %v650
        %v652 = vpop.f32.mrf.mxu0
        %653 = vmatprep.mubr.bf16.mxu0 0
        %654 = vmatmul.mubr.bf16.gmra.mxu0 %v515
        %v655 = vpop.f32.mrf.mxu0
        %v656 = vadd.f32 %v383, %v655
        %v657 = vpop.f32.mrf.mxu0
        %v658 = vpop.f32.mrf.mxu0
        %v659 = vadd.f32 %v383, %v658
        %v660 = vpop.f32.mrf.mxu0
        %661 = vmatprep.mubr.bf16.mxu0 0
        %662 = vmatmul.mubr.bf16.gmra.mxu0 %v518
        %v663 = vpop.f32.mrf.mxu0
        %v664 = vadd.f32 %v383, %v663
        %v665 = vpop.f32.mrf.mxu0
        %v666 = vpop.f32.mrf.mxu0
        %v667 = vadd.f32 %v383, %v666
        %v668 = vpop.f32.mrf.mxu0
        %669 = vmatprep.mubr.bf16.mxu0 0
        %670 = vmatmul.mubr.bf16.gmra.mxu0 %v521
        %v671 = vpop.f32.mrf.mxu0
        %v672 = vadd.f32 %v383, %v671
        %v673 = vpop.f32.mrf.mxu0
        %v674 = vpop.f32.mrf.mxu0
        %v675 = vadd.f32 %v383, %v674
        %v676 = vpop.f32.mrf.mxu0
        %677 = vmatprep.mubr.bf16.mxu0 0
        %678 = vmatmul.mubr.bf16.gmra.mxu0 %v524
        %v679 = vpop.f32.mrf.mxu0
        %v680 = vadd.f32 %v383, %v679
        %v681 = vpop.f32.mrf.mxu0
        %v682 = vpop.f32.mrf.mxu0
        %v683 = vadd.f32 %v383, %v682
        %v684 = vpop.f32.mrf.mxu0
        %685 = vmatprep.mubr.bf16.mxu0 0
        %686 = vmatmul.mubr.bf16.gmra.mxu0 %v527
        %v687 = vpop.f32.mrf.mxu0
        %v688 = vadd.f32 %v383, %v687
        %v689 = vpop.f32.mrf.mxu0
        %v690 = vpop.f32.mrf.mxu0
        %v691 = vadd.f32 %v383, %v690
        %v692 = vpop.f32.mrf.mxu0
        %693 = vdwg.mxu0
        %v694 = vmax.f32 %v568, 0.0
        %v695 = vmax.f32 %v571, 0.0
        %v696 = vmax.f32 %v576, 0.0
        %v697 = vmax.f32 %v579, 0.0
        %v698 = vmax.f32 %v584, 0.0
        %v699 = vmax.f32 %v587, 0.0
        %v700 = vmax.f32 %v592, 0.0
        %v701 = vmax.f32 %v595, 0.0
        %v702 = vmax.f32 %v600, 0.0
        %v703 = vmax.f32 %v603, 0.0
        %v704 = vmax.f32 %v608, 0.0
        %v705 = vmax.f32 %v611, 0.0
        %v706 = vmax.f32 %v616, 0.0
        %v707 = vmax.f32 %v619, 0.0
        %v708 = vmax.f32 %v624, 0.0
        %v709 = vmax.f32 %v627, 0.0
        %v710 = vmax.f32 %v632, 0.0
        %v711 = vmax.f32 %v635, 0.0
        %v712 = vmax.f32 %v640, 0.0
        %v713 = vmax.f32 %v643, 0.0
        %v714 = vmax.f32 %v648, 0.0
        %v715 = vmax.f32 %v651, 0.0
        %v716 = vmax.f32 %v656, 0.0
        %v717 = vmax.f32 %v659, 0.0
        %v718 = vmax.f32 %v664, 0.0
        %v719 = vmax.f32 %v667, 0.0
        %v720 = vmax.f32 %v672, 0.0
        %v721 = vmax.f32 %v675, 0.0
        %v722 = vmax.f32 %v680, 0.0
        %v723 = vmax.f32 %v683, 0.0
        %v724 = vmax.f32 %v688, 0.0
        %v725 = vmax.f32 %v691, 0.0
        %v726 = vpack.c.bf16 %v695, %v694
        %v727 = vpack.c.bf16 %v697, %v696
        %v728 = vpack.c.bf16 %v699, %v698
        %v729 = vpack.c.bf16 %v701, %v700
        %v730 = vpack.c.bf16 %v703, %v702
        %v731 = vpack.c.bf16 %v705, %v704
        %v732 = vpack.c.bf16 %v707, %v706
        %v733 = vpack.c.bf16 %v709, %v708
        %v734 = vpack.c.bf16 %v711, %v710
        %v735 = vpack.c.bf16 %v713, %v712
        %v736 = vpack.c.bf16 %v715, %v714
        %v737 = vpack.c.bf16 %v717, %v716
        %v738 = vpack.c.bf16 %v719, %v718
        %v739 = vpack.c.bf16 %v721, %v720
        %v740 = vpack.c.bf16 %v723, %v722
        %v741 = vpack.c.bf16 %v725, %v724
        %v742 = vld [vmem:[%s3] sm:$0xf]
        %v743 = vld [vmem:[%s3 + $0x4] sm:$0xf]
        %v744 = vld [vmem:[%s3 + $0x8] sm:$0xf]
        %v745 = vld [vmem:[%s3 + $0xc] sm:$0xf]
        %v746 = vld [vmem:[%s4] sm:$0x1]
        %v748 = vlaneseq
        %v749 = vshrl.u32 %v748, 7
        %v750 = vsub.s32 0, %v749
        %v751 = vrot.slane %v746, %v750
        %v757 = vunpack.c.l.b16 %v742
        %v758 = vunpack.c.l.b16 %v743
        %v759 = vunpack.c.l.b16 %v744
        %v760 = vunpack.c.l.b16 %v745
        %v761 = vpack.c.b16 %v758, %v757
        %v762 = vpack.c.b16 %v760, %v759
        %vm765 = vcmask 261120
        %v767 = vsel %vm765, %v726, 0
        %v770 = vsel %vm765, %v727, 0
        %v773 = vsel %vm765, %v728, 0
        %v776 = vsel %vm765, %v729, 0
        %v779 = vsel %vm765, %v730, 0
        %v782 = vsel %vm765, %v731, 0
        %v785 = vsel %vm765, %v732, 0
        %v788 = vsel %vm765, %v733, 0
        %v791 = vsel %vm765, %v734, 0
        %v794 = vsel %vm765, %v735, 0
        %v797 = vsel %vm765, %v736, 0
        %v800 = vsel %vm765, %v737, 0
        %v803 = vsel %vm765, %v738, 0
        %v806 = vsel %vm765, %v739, 0
        %v809 = vsel %vm765, %v740, 0
        %v812 = vsel %vm765, %v741, 0
        %814 = vmatprep.subr.bf16.mxu0 0
        %815 = vmatpush1.bf16.msra.mxu0 0
        %816 = vmatprep.subr.bf16.mxu0 0
        %817 = vmatpush1.bf16.msra.mxu0 0
        %818 = vmatprep.subr.bf16.mxu0 0
        %819 = vmatpush1.bf16.msra.mxu0 0
        %820 = vmatprep.subr.bf16.mxu0 0
        %821 = vmatpush1.bf16.msra.mxu0 0
        %822 = vmatprep.subr.bf16.mxu0 0
        %823 = vmatpush1.bf16.msra.mxu0 0
        %824 = vmatprep.subr.bf16.mxu0 0
        %825 = vmatpush1.bf16.msra.mxu0 0
        %826 = vmatprep.subr.bf16.mxu0 0
        %827 = vmatpush1.bf16.msra.mxu0 %v762
        %828 = vmatprep.subr.bf16.mxu0 0
        %829 = vmatpush1.bf16.msra.mxu0 %v761
        %830 = vmatprep.subr.bf16.mxu0 0
        %831 = vmatpush2.bf16.msra.mxu0 0
        %832 = vmatprep.subr.bf16.mxu0 0
        %833 = vmatpush2.bf16.msra.mxu0 0
        %834 = vmatprep.subr.bf16.mxu0 0
        %835 = vmatpush2.bf16.msra.mxu0 0
        %836 = vmatprep.subr.bf16.mxu0 0
        %837 = vmatpush2.bf16.msra.mxu0 0
        %838 = vmatprep.subr.bf16.mxu0 0
        %839 = vmatpush2.bf16.msra.mxu0 0
        %840 = vmatprep.subr.bf16.mxu0 0
        %841 = vmatpush2.bf16.msra.mxu0 0
        %842 = vmatprep.subr.bf16.mxu0 0
        %843 = vmatpush2.bf16.msra.mxu0 0
        %844 = vmatprep.subr.bf16.mxu0 0
        %845 = vmatpush2.bf16.msra.mxu0 0
        %846 = vmatprep.mubr.bf16.mxu0 0
        %847 = vmatmul.mubr.bf16.gmra.mxu0 %v767
        %v848 = vpop.f32.mrf.mxu0
        %v849 = vadd.f32 %v751, %v848
        %v850 = vpop.f32.mrf.mxu0
        %v851 = vpop.f32.mrf.mxu0
        %v852 = vadd.f32 %v751, %v851
        %v853 = vpop.f32.mrf.mxu0
        %854 = vmatprep.mubr.bf16.mxu0 0
        %855 = vmatmul.mubr.bf16.gmra.mxu0 %v770
        %v856 = vpop.f32.mrf.mxu0
        %v857 = vadd.f32 %v751, %v856
        %v858 = vpop.f32.mrf.mxu0
        %v859 = vpop.f32.mrf.mxu0
        %v860 = vadd.f32 %v751, %v859
        %v861 = vpop.f32.mrf.mxu0
        %862 = vmatprep.mubr.bf16.mxu0 0
        %863 = vmatmul.mubr.bf16.gmra.mxu0 %v773
        %v864 = vpop.f32.mrf.mxu0
        %v865 = vadd.f32 %v751, %v864
        %v866 = vpop.f32.mrf.mxu0
        %v867 = vpop.f32.mrf.mxu0
        %v868 = vadd.f32 %v751, %v867
        %v869 = vpop.f32.mrf.mxu0
        %870 = vmatprep.mubr.bf16.mxu0 0
        %871 = vmatmul.mubr.bf16.gmra.mxu0 %v776
        %v872 = vpop.f32.mrf.mxu0
        %v873 = vadd.f32 %v751, %v872
        %v874 = vpop.f32.mrf.mxu0
        %v875 = vpop.f32.mrf.mxu0
        %v876 = vadd.f32 %v751, %v875
        %v877 = vpop.f32.mrf.mxu0
        %878 = vmatprep.mubr.bf16.mxu0 0
        %879 = vmatmul.mubr.bf16.gmra.mxu0 %v779
        %v880 = vpop.f32.mrf.mxu0
        %v881 = vadd.f32 %v751, %v880
        %v882 = vpop.f32.mrf.mxu0
        %v883 = vpop.f32.mrf.mxu0
        %v884 = vadd.f32 %v751, %v883
        %v885 = vpop.f32.mrf.mxu0
        %886 = vmatprep.mubr.bf16.mxu0 0
        %887 = vmatmul.mubr.bf16.gmra.mxu0 %v782
        %v888 = vpop.f32.mrf.mxu0
        %v889 = vadd.f32 %v751, %v888
        %v890 = vpop.f32.mrf.mxu0
        %v891 = vpop.f32.mrf.mxu0
        %v892 = vadd.f32 %v751, %v891
        %v893 = vpop.f32.mrf.mxu0
        %894 = vmatprep.mubr.bf16.mxu0 0
        %895 = vmatmul.mubr.bf16.gmra.mxu0 %v785
        %v896 = vpop.f32.mrf.mxu0
        %v897 = vadd.f32 %v751, %v896
        %v898 = vpop.f32.mrf.mxu0
        %v899 = vpop.f32.mrf.mxu0
        %v900 = vadd.f32 %v751, %v899
        %v901 = vpop.f32.mrf.mxu0
        %902 = vmatprep.mubr.bf16.mxu0 0
        %903 = vmatmul.mubr.bf16.gmra.mxu0 %v788
        %v904 = vpop.f32.mrf.mxu0
        %v905 = vadd.f32 %v751, %v904
        %v906 = vpop.f32.mrf.mxu0
        %v907 = vpop.f32.mrf.mxu0
        %v908 = vadd.f32 %v751, %v907
        %v909 = vpop.f32.mrf.mxu0
        %910 = vmatprep.mubr.bf16.mxu0 0
        %911 = vmatmul.mubr.bf16.gmra.mxu0 %v791
        %v912 = vpop.f32.mrf.mxu0
        %v913 = vadd.f32 %v751, %v912
        %v914 = vpop.f32.mrf.mxu0
        %v915 = vpop.f32.mrf.mxu0
        %v916 = vadd.f32 %v751, %v915
        %v917 = vpop.f32.mrf.mxu0
        %918 = vmatprep.mubr.bf16.mxu0 0
        %919 = vmatmul.mubr.bf16.gmra.mxu0 %v794
        %v920 = vpop.f32.mrf.mxu0
        %v921 = vadd.f32 %v751, %v920
        %v922 = vpop.f32.mrf.mxu0
        %v923 = vpop.f32.mrf.mxu0
        %v924 = vadd.f32 %v751, %v923
        %v925 = vpop.f32.mrf.mxu0
        %926 = vmatprep.mubr.bf16.mxu0 0
        %927 = vmatmul.mubr.bf16.gmra.mxu0 %v797
        %v928 = vpop.f32.mrf.mxu0
        %v929 = vadd.f32 %v751, %v928
        %v930 = vpop.f32.mrf.mxu0
        %v931 = vpop.f32.mrf.mxu0
        %v932 = vadd.f32 %v751, %v931
        %v933 = vpop.f32.mrf.mxu0
        %934 = vmatprep.mubr.bf16.mxu0 0
        %935 = vmatmul.mubr.bf16.gmra.mxu0 %v800
        %v936 = vpop.f32.mrf.mxu0
        %v937 = vadd.f32 %v751, %v936
        %v938 = vpop.f32.mrf.mxu0
        %v939 = vpop.f32.mrf.mxu0
        %v940 = vadd.f32 %v751, %v939
        %v941 = vpop.f32.mrf.mxu0
        %942 = vmatprep.mubr.bf16.mxu0 0
        %943 = vmatmul.mubr.bf16.gmra.mxu0 %v803
        %v944 = vpop.f32.mrf.mxu0
        %v945 = vadd.f32 %v751, %v944
        %v946 = vpop.f32.mrf.mxu0
        %v947 = vpop.f32.mrf.mxu0
        %v948 = vadd.f32 %v751, %v947
        %v949 = vpop.f32.mrf.mxu0
        %950 = vmatprep.mubr.bf16.mxu0 0
        %951 = vmatmul.mubr.bf16.gmra.mxu0 %v806
        %v952 = vpop.f32.mrf.mxu0
        %v953 = vadd.f32 %v751, %v952
        %v954 = vpop.f32.mrf.mxu0
        %v955 = vpop.f32.mrf.mxu0
        %v956 = vadd.f32 %v751, %v955
        %v957 = vpop.f32.mrf.mxu0
        %958 = vmatprep.mubr.bf16.mxu0 0
        %959 = vmatmul.mubr.bf16.gmra.mxu0 %v809
        %v960 = vpop.f32.mrf.mxu0
        %v961 = vadd.f32 %v751, %v960
        %v962 = vpop.f32.mrf.mxu0
        %v963 = vpop.f32.mrf.mxu0
        %v964 = vadd.f32 %v751, %v963
        %v965 = vpop.f32.mrf.mxu0
        %966 = vmatprep.mubr.bf16.mxu0 0
        %967 = vmatmul.mubr.bf16.gmra.mxu0 %v812
        %v968 = vpop.f32.mrf.mxu0
        %v969 = vadd.f32 %v751, %v968
        %v970 = vpop.f32.mrf.mxu0
        %v971 = vpop.f32.mrf.mxu0
        %v972 = vadd.f32 %v751, %v971
        %v973 = vpop.f32.mrf.mxu0
        %974 = vdwg.mxu0
        %v975 = vxor.u32 %v849, 2147483648
        %v976 = vxor.u32 %v852, 2147483648
        %v977 = vxor.u32 %v857, 2147483648
        %v978 = vxor.u32 %v860, 2147483648
        %v979 = vxor.u32 %v865, 2147483648
        %v980 = vxor.u32 %v868, 2147483648
        %v981 = vxor.u32 %v873, 2147483648
        %v982 = vxor.u32 %v876, 2147483648
        %v983 = vxor.u32 %v881, 2147483648
        %v984 = vxor.u32 %v884, 2147483648
        %v985 = vxor.u32 %v889, 2147483648
        %v986 = vxor.u32 %v892, 2147483648
        %v987 = vxor.u32 %v897, 2147483648
        %v988 = vxor.u32 %v900, 2147483648
        %v989 = vxor.u32 %v905, 2147483648
        %v990 = vxor.u32 %v908, 2147483648
        %v991 = vxor.u32 %v913, 2147483648
        %v992 = vxor.u32 %v916, 2147483648
        %v993 = vxor.u32 %v921, 2147483648
        %v994 = vxor.u32 %v924, 2147483648
        %v995 = vxor.u32 %v929, 2147483648
        %v996 = vxor.u32 %v932, 2147483648
        %v997 = vxor.u32 %v937, 2147483648
        %v998 = vxor.u32 %v940, 2147483648
        %v999 = vxor.u32 %v945, 2147483648
        %v1000 = vxor.u32 %v948, 2147483648
        %v1001 = vxor.u32 %v953, 2147483648
        %v1002 = vxor.u32 %v956, 2147483648
        %v1003 = vxor.u32 %v961, 2147483648
        %v1004 = vxor.u32 %v964, 2147483648
        %v1005 = vxor.u32 %v969, 2147483648
        %v1006 = vxor.u32 %v972, 2147483648
        %v1007 = vmul.f32 %v975, 1.442695
        %v1008 = vpow.pop %v1007
        %v1009 = vmul.f32 %v976, 1.442695
        %v1010 = vpow.pop %v1009
        %v1011 = vmul.f32 %v977, 1.442695
        %v1012 = vpow.pop %v1011
        %v1013 = vmul.f32 %v978, 1.442695
        %v1014 = vpow.pop %v1013
        %v1015 = vmul.f32 %v979, 1.442695
        %v1016 = vpow.pop %v1015
        %v1017 = vmul.f32 %v980, 1.442695
        %v1018 = vpow.pop %v1017
        %v1019 = vmul.f32 %v981, 1.442695
        %v1020 = vpow.pop %v1019
        %v1021 = vmul.f32 %v982, 1.442695
        %v1022 = vpow.pop %v1021
        %v1023 = vmul.f32 %v983, 1.442695
        %v1024 = vpow.pop %v1023
        %v1025 = vmul.f32 %v984, 1.442695
        %v1026 = vpow.pop %v1025
        %v1027 = vmul.f32 %v985, 1.442695
        %v1028 = vpow.pop %v1027
        %v1029 = vmul.f32 %v986, 1.442695
        %v1030 = vpow.pop %v1029
        %v1031 = vmul.f32 %v987, 1.442695
        %v1032 = vpow.pop %v1031
        %v1033 = vmul.f32 %v988, 1.442695
        %v1034 = vpow.pop %v1033
        %v1035 = vmul.f32 %v989, 1.442695
        %v1036 = vpow.pop %v1035
        %v1037 = vmul.f32 %v990, 1.442695
        %v1038 = vpow.pop %v1037
        %v1039 = vmul.f32 %v991, 1.442695
        %v1040 = vpow.pop %v1039
        %v1041 = vmul.f32 %v992, 1.442695
        %v1042 = vpow.pop %v1041
        %v1043 = vmul.f32 %v993, 1.442695
        %v1044 = vpow.pop %v1043
        %v1045 = vmul.f32 %v994, 1.442695
        %v1046 = vpow.pop %v1045
        %v1047 = vmul.f32 %v995, 1.442695
        %v1048 = vpow.pop %v1047
        %v1049 = vmul.f32 %v996, 1.442695
        %v1050 = vpow.pop %v1049
        %v1051 = vmul.f32 %v997, 1.442695
        %v1052 = vpow.pop %v1051
        %v1053 = vmul.f32 %v998, 1.442695
        %v1054 = vpow.pop %v1053
        %v1055 = vmul.f32 %v999, 1.442695
        %v1056 = vpow.pop %v1055
        %v1057 = vmul.f32 %v1000, 1.442695
        %v1058 = vpow.pop %v1057
        %v1059 = vmul.f32 %v1001, 1.442695
        %v1060 = vpow.pop %v1059
        %v1061 = vmul.f32 %v1002, 1.442695
        %v1062 = vpow.pop %v1061
        %v1063 = vmul.f32 %v1003, 1.442695
        %v1064 = vpow.pop %v1063
        %v1065 = vmul.f32 %v1004, 1.442695
        %v1066 = vpow.pop %v1065
        %v1067 = vmul.f32 %v1005, 1.442695
        %v1068 = vpow.pop %v1067
        %v1069 = vmul.f32 %v1006, 1.442695
        %v1070 = vpow.pop %v1069
        %v1071 = vadd.f32 %v1008, 1.0
        %v1072 = vadd.f32 %v1010, 1.0
        %v1073 = vadd.f32 %v1012, 1.0
        %v1074 = vadd.f32 %v1014, 1.0
        %v1075 = vadd.f32 %v1016, 1.0
        %v1076 = vadd.f32 %v1018, 1.0
        %v1077 = vadd.f32 %v1020, 1.0
        %v1078 = vadd.f32 %v1022, 1.0
        %v1079 = vadd.f32 %v1024, 1.0
        %v1080 = vadd.f32 %v1026, 1.0
        %v1081 = vadd.f32 %v1028, 1.0
        %v1082 = vadd.f32 %v1030, 1.0
        %v1083 = vadd.f32 %v1032, 1.0
        %v1084 = vadd.f32 %v1034, 1.0
        %v1085 = vadd.f32 %v1036, 1.0
        %v1086 = vadd.f32 %v1038, 1.0
        %v1087 = vadd.f32 %v1040, 1.0
        %v1088 = vadd.f32 %v1042, 1.0
        %v1089 = vadd.f32 %v1044, 1.0
        %v1090 = vadd.f32 %v1046, 1.0
        %v1091 = vadd.f32 %v1048, 1.0
        %v1092 = vadd.f32 %v1050, 1.0
        %v1093 = vadd.f32 %v1052, 1.0
        %v1094 = vadd.f32 %v1054, 1.0
        %v1095 = vadd.f32 %v1056, 1.0
        %v1096 = vadd.f32 %v1058, 1.0
        %v1097 = vadd.f32 %v1060, 1.0
        %v1098 = vadd.f32 %v1062, 1.0
        %v1099 = vadd.f32 %v1064, 1.0
        %v1100 = vadd.f32 %v1066, 1.0
        %v1101 = vadd.f32 %v1068, 1.0
        %v1102 = vadd.f32 %v1070, 1.0
        %v1103 = vrcp.pop %v1071
        %v1104 = vmul.f32 1.0, %v1103
        %v1105 = vrcp.pop %v1072
        %v1106 = vmul.f32 1.0, %v1105
        %v1107 = vrcp.pop %v1073
        %v1108 = vmul.f32 1.0, %v1107
        %v1109 = vrcp.pop %v1074
        %v1110 = vmul.f32 1.0, %v1109
        %v1111 = vrcp.pop %v1075
        %v1112 = vmul.f32 1.0, %v1111
        %v1113 = vrcp.pop %v1076
        %v1114 = vmul.f32 1.0, %v1113
        %v1115 = vrcp.pop %v1077
        %v1116 = vmul.f32 1.0, %v1115
        %v1117 = vrcp.pop %v1078
        %v1118 = vmul.f32 1.0, %v1117
        %v1119 = vrcp.pop %v1079
        %v1120 = vmul.f32 1.0, %v1119
        %v1121 = vrcp.pop %v1080
        %v1122 = vmul.f32 1.0, %v1121
        %v1123 = vrcp.pop %v1081
        %v1124 = vmul.f32 1.0, %v1123
        %v1125 = vrcp.pop %v1082
        %v1126 = vmul.f32 1.0, %v1125
        %v1127 = vrcp.pop %v1083
        %v1128 = vmul.f32 1.0, %v1127
        %v1129 = vrcp.pop %v1084
        %v1130 = vmul.f32 1.0, %v1129
        %v1131 = vrcp.pop %v1085
        %v1132 = vmul.f32 1.0, %v1131
        %v1133 = vrcp.pop %v1086
        %v1134 = vmul.f32 1.0, %v1133
        %v1135 = vrcp.pop %v1087
        %v1136 = vmul.f32 1.0, %v1135
        %v1137 = vrcp.pop %v1088
        %v1138 = vmul.f32 1.0, %v1137
        %v1139 = vrcp.pop %v1089
        %v1140 = vmul.f32 1.0, %v1139
        %v1141 = vrcp.pop %v1090
        %v1142 = vmul.f32 1.0, %v1141
        %v1143 = vrcp.pop %v1091
        %v1144 = vmul.f32 1.0, %v1143
        %v1145 = vrcp.pop %v1092
        %v1146 = vmul.f32 1.0, %v1145
        %v1147 = vrcp.pop %v1093
        %v1148 = vmul.f32 1.0, %v1147
        %v1149 = vrcp.pop %v1094
        %v1150 = vmul.f32 1.0, %v1149
        %v1151 = vrcp.pop %v1095
        %v1152 = vmul.f32 1.0, %v1151
        %v1153 = vrcp.pop %v1096
        %v1154 = vmul.f32 1.0, %v1153
        %v1155 = vrcp.pop %v1097
        %v1156 = vmul.f32 1.0, %v1155
        %v1157 = vrcp.pop %v1098
        %v1158 = vmul.f32 1.0, %v1157
        %v1159 = vrcp.pop %v1099
        %v1160 = vmul.f32 1.0, %v1159
        %v1161 = vrcp.pop %v1100
        %v1162 = vmul.f32 1.0, %v1161
        %v1163 = vrcp.pop %v1101
        %v1164 = vmul.f32 1.0, %v1163
        %v1165 = vrcp.pop %v1102
        %v1166 = vmul.f32 1.0, %v1165
        %v1167 = vmul.f32 %v1104, %v1104
        %v1168 = vmul.f32 %v1106, %v1106
        %v1169 = vmul.f32 %v1108, %v1108
        %v1170 = vmul.f32 %v1110, %v1110
        %v1171 = vmul.f32 %v1112, %v1112
        %v1172 = vmul.f32 %v1114, %v1114
        %v1173 = vmul.f32 %v1116, %v1116
        %v1174 = vmul.f32 %v1118, %v1118
        %v1175 = vmul.f32 %v1120, %v1120
        %v1176 = vmul.f32 %v1122, %v1122
        %v1177 = vmul.f32 %v1124, %v1124
        %v1178 = vmul.f32 %v1126, %v1126
        %v1179 = vmul.f32 %v1128, %v1128
        %v1180 = vmul.f32 %v1130, %v1130
        %v1181 = vmul.f32 %v1132, %v1132
        %v1182 = vmul.f32 %v1134, %v1134
        %v1183 = vmul.f32 %v1136, %v1136
        %v1184 = vmul.f32 %v1138, %v1138
        %v1185 = vmul.f32 %v1140, %v1140
        %v1186 = vmul.f32 %v1142, %v1142
        %v1187 = vmul.f32 %v1144, %v1144
        %v1188 = vmul.f32 %v1146, %v1146
        %v1189 = vmul.f32 %v1148, %v1148
        %v1190 = vmul.f32 %v1150, %v1150
        %v1191 = vmul.f32 %v1152, %v1152
        %v1192 = vmul.f32 %v1154, %v1154
        %v1193 = vmul.f32 %v1156, %v1156
        %v1194 = vmul.f32 %v1158, %v1158
        %v1195 = vmul.f32 %v1160, %v1160
        %v1196 = vmul.f32 %v1162, %v1162
        %v1197 = vmul.f32 %v1164, %v1164
        %v1198 = vmul.f32 %v1166, %v1166
        %v1199 = vsel %vm765, %v1167, 0.0
        %1200 = vadd.xlane.f32.xlu0 %v1199
        %v1201 = vpop.xlane.xlu0 %1200
        %v1202 = vsel %vm765, %v1168, 0.0
        %1203 = vadd.xlane.f32.xlu0 %v1202
        %v1204 = vpop.xlane.xlu0 %1203
        %v1205 = vsel %vm765, %v1169, 0.0
        %1206 = vadd.xlane.f32.xlu0 %v1205
        %v1207 = vpop.xlane.xlu0 %1206
        %v1208 = vsel %vm765, %v1170, 0.0
        %1209 = vadd.xlane.f32.xlu0 %v1208
        %v1210 = vpop.xlane.xlu0 %1209
        %v1211 = vsel %vm765, %v1171, 0.0
        %1212 = vadd.xlane.f32.xlu0 %v1211
        %v1213 = vpop.xlane.xlu0 %1212
        %v1214 = vsel %vm765, %v1172, 0.0
        %1215 = vadd.xlane.f32.xlu0 %v1214
        %v1216 = vpop.xlane.xlu0 %1215
        %v1217 = vsel %vm765, %v1173, 0.0
        %1218 = vadd.xlane.f32.xlu0 %v1217
        %v1219 = vpop.xlane.xlu0 %1218
        %v1220 = vsel %vm765, %v1174, 0.0
        %1221 = vadd.xlane.f32.xlu0 %v1220
        %v1222 = vpop.xlane.xlu0 %1221
        %v1223 = vsel %vm765, %v1175, 0.0
        %1224 = vadd.xlane.f32.xlu0 %v1223
        %v1225 = vpop.xlane.xlu0 %1224
        %v1226 = vsel %vm765, %v1176, 0.0
        %1227 = vadd.xlane.f32.xlu0 %v1226
        %v1228 = vpop.xlane.xlu0 %1227
        %v1229 = vsel %vm765, %v1177, 0.0
        %1230 = vadd.xlane.f32.xlu0 %v1229
        %v1231 = vpop.xlane.xlu0 %1230
        %v1232 = vsel %vm765, %v1178, 0.0
        %1233 = vadd.xlane.f32.xlu0 %v1232
        %v1234 = vpop.xlane.xlu0 %1233
        %v1235 = vsel %vm765, %v1179, 0.0
        %1236 = vadd.xlane.f32.xlu0 %v1235
        %v1237 = vpop.xlane.xlu0 %1236
        %v1238 = vsel %vm765, %v1180, 0.0
        %1239 = vadd.xlane.f32.xlu0 %v1238
        %v1240 = vpop.xlane.xlu0 %1239
        %v1241 = vsel %vm765, %v1181, 0.0
        %1242 = vadd.xlane.f32.xlu0 %v1241
        %v1243 = vpop.xlane.xlu0 %1242
        %v1244 = vsel %vm765, %v1182, 0.0
        %1245 = vadd.xlane.f32.xlu0 %v1244
        %v1246 = vpop.xlane.xlu0 %1245
        %v1247 = vsel %vm765, %v1183, 0.0
        %1248 = vadd.xlane.f32.xlu0 %v1247
        %v1249 = vpop.xlane.xlu0 %1248
        %v1250 = vsel %vm765, %v1184, 0.0
        %1251 = vadd.xlane.f32.xlu0 %v1250
        %v1252 = vpop.xlane.xlu0 %1251
        %v1253 = vsel %vm765, %v1185, 0.0
        %1254 = vadd.xlane.f32.xlu0 %v1253
        %v1255 = vpop.xlane.xlu0 %1254
        %v1256 = vsel %vm765, %v1186, 0.0
        %1257 = vadd.xlane.f32.xlu0 %v1256
        %v1258 = vpop.xlane.xlu0 %1257
        %v1259 = vsel %vm765, %v1187, 0.0
        %1260 = vadd.xlane.f32.xlu0 %v1259
        %v1261 = vpop.xlane.xlu0 %1260
        %v1262 = vsel %vm765, %v1188, 0.0
        %1263 = vadd.xlane.f32.xlu0 %v1262
        %v1264 = vpop.xlane.xlu0 %1263
        %v1265 = vsel %vm765, %v1189, 0.0
        %1266 = vadd.xlane.f32.xlu0 %v1265
        %v1267 = vpop.xlane.xlu0 %1266
        %v1268 = vsel %vm765, %v1190, 0.0
        %1269 = vadd.xlane.f32.xlu0 %v1268
        %v1270 = vpop.xlane.xlu0 %1269
        %v1271 = vsel %vm765, %v1191, 0.0
        %1272 = vadd.xlane.f32.xlu0 %v1271
        %v1273 = vpop.xlane.xlu0 %1272
        %v1274 = vsel %vm765, %v1192, 0.0
        %1275 = vadd.xlane.f32.xlu0 %v1274
        %v1276 = vpop.xlane.xlu0 %1275
        %v1277 = vsel %vm765, %v1193, 0.0
        %1278 = vadd.xlane.f32.xlu0 %v1277
        %v1279 = vpop.xlane.xlu0 %1278
        %v1280 = vsel %vm765, %v1194, 0.0
        %1281 = vadd.xlane.f32.xlu0 %v1280
        %v1282 = vpop.xlane.xlu0 %1281
        %v1283 = vsel %vm765, %v1195, 0.0
        %1284 = vadd.xlane.f32.xlu0 %v1283
        %v1285 = vpop.xlane.xlu0 %1284
        %v1286 = vsel %vm765, %v1196, 0.0
        %1287 = vadd.xlane.f32.xlu0 %v1286
        %v1288 = vpop.xlane.xlu0 %1287
        %v1289 = vsel %vm765, %v1197, 0.0
        %1290 = vadd.xlane.f32.xlu0 %v1289
        %v1291 = vpop.xlane.xlu0 %1290
        %v1292 = vsel %vm765, %v1198, 0.0
        %1293 = vadd.xlane.f32.xlu0 %v1292
        %v1294 = vpop.xlane.xlu0 %1293
        %v1295 = vld [vmem:[%s5] sm:$0xff]
        %v1296 = vld [vmem:[%s5 + $0x8] sm:$0xff]
        %v1297 = vld [vmem:[%s5 + $0x10] sm:$0xff]
        %v1298 = vld [vmem:[%s5 + $0x18] sm:$0xff]
        %v1300 = vsel %vm765, %v1104, 0
        %v1303 = vsel %vm765, %v1106, 0
        %v1306 = vsel %vm765, %v1108, 0
        %v1309 = vsel %vm765, %v1110, 0
        %v1312 = vsel %vm765, %v1112, 0
        %v1315 = vsel %vm765, %v1114, 0
        %v1318 = vsel %vm765, %v1116, 0
        %v1321 = vsel %vm765, %v1118, 0
        %v1324 = vsel %vm765, %v1120, 0
        %v1327 = vsel %vm765, %v1122, 0
        %v1330 = vsel %vm765, %v1124, 0
        %v1333 = vsel %vm765, %v1126, 0
        %v1336 = vsel %vm765, %v1128, 0
        %v1339 = vsel %vm765, %v1130, 0
        %v1342 = vsel %vm765, %v1132, 0
        %v1345 = vsel %vm765, %v1134, 0
        %v1348 = vsel %vm765, %v1136, 0
        %v1351 = vsel %vm765, %v1138, 0
        %v1354 = vsel %vm765, %v1140, 0
        %v1357 = vsel %vm765, %v1142, 0
        %v1360 = vsel %vm765, %v1144, 0
        %v1363 = vsel %vm765, %v1146, 0
        %v1366 = vsel %vm765, %v1148, 0
        %v1369 = vsel %vm765, %v1150, 0
        %v1372 = vsel %vm765, %v1152, 0
        %v1375 = vsel %vm765, %v1154, 0
        %v1378 = vsel %vm765, %v1156, 0
        %v1381 = vsel %vm765, %v1158, 0
        %v1384 = vsel %vm765, %v1160, 0
        %v1387 = vsel %vm765, %v1162, 0
        %v1390 = vsel %vm765, %v1164, 0
        %v1393 = vsel %vm765, %v1166, 0
        %1395 = vmatprep.subr.mxu0 0.0
        %1396 = vmatpush1.msra.mxu0 0.0
        %1397 = vmatprep.subr.mxu0 0.0
        %1398 = vmatpush1.msra.mxu0 0.0
        %1399 = vmatprep.subr.mxu0 0.0
        %1400 = vmatpush1.msra.mxu0 0.0
        %1401 = vmatprep.subr.mxu0 0.0
        %1402 = vmatpush1.msra.mxu0 0.0
        %1403 = vmatprep.subr.mxu0 0.0
        %1404 = vmatpush1.msra.mxu0 0.0
        %1405 = vmatprep.subr.mxu0 0.0
        %1406 = vmatpush1.msra.mxu0 0.0
        %1407 = vmatprep.subr.mxu0 0.0
        %1408 = vmatpush1.msra.mxu0 0.0
        %1409 = vmatprep.subr.mxu0 0.0
        %1410 = vmatpush1.msra.mxu0 0.0
        %1411 = vmatprep.subr.mxu0 0.0
        %1412 = vmatpush1.msra.mxu0 0.0
        %1413 = vmatprep.subr.mxu0 0.0
        %1414 = vmatpush1.msra.mxu0 0.0
        %1415 = vmatprep.subr.mxu0 0.0
        %1416 = vmatpush1.msra.mxu0 0.0
        %1417 = vmatprep.subr.mxu0 0.0
        %1418 = vmatpush1.msra.mxu0 0.0
        %1419 = vmatprep.subr.mxu0 0.0
        %1420 = vmatpush1.msra.mxu0 %v1298
        %1421 = vmatprep.subr.mxu0 0.0
        %1422 = vmatpush1.msra.mxu0 %v1297
        %1423 = vmatprep.subr.mxu0 0.0
        %1424 = vmatpush1.msra.mxu0 %v1296
        %1425 = vmatprep.subr.mxu0 0.0
        %1426 = vmatpush1.msra.mxu0 %v1295
        %1427 = vmatprep.subr.mxu0 0.0
        %1428 = vmatpush2.msra.mxu0 0.0
        %1429 = vmatprep.subr.mxu0 0.0
        %1430 = vmatpush2.msra.mxu0 0.0
        %1431 = vmatprep.subr.mxu0 0.0
        %1432 = vmatpush2.msra.mxu0 0.0
        %1433 = vmatprep.subr.mxu0 0.0
        %1434 = vmatpush2.msra.mxu0 0.0
        %1435 = vmatprep.subr.mxu0 0.0
        %1436 = vmatpush2.msra.mxu0 0.0
        %1437 = vmatprep.subr.mxu0 0.0
        %1438 = vmatpush2.msra.mxu0 0.0
        %1439 = vmatprep.subr.mxu0 0.0
        %1440 = vmatpush2.msra.mxu0 0.0
        %1441 = vmatprep.subr.mxu0 0.0
        %1442 = vmatpush2.msra.mxu0 0.0
        %1443 = vmatprep.subr.mxu0 0.0
        %1444 = vmatpush2.msra.mxu0 0.0
        %1445 = vmatprep.subr.mxu0 0.0
        %1446 = vmatpush2.msra.mxu0 0.0
        %1447 = vmatprep.subr.mxu0 0.0
        %1448 = vmatpush2.msra.mxu0 0.0
        %1449 = vmatprep.subr.mxu0 0.0
        %1450 = vmatpush2.msra.mxu0 0.0
        %1451 = vmatprep.subr.mxu0 0.0
        %1452 = vmatpush2.msra.mxu0 0.0
        %1453 = vmatprep.subr.mxu0 0.0
        %1454 = vmatpush2.msra.mxu0 0.0
        %1455 = vmatprep.subr.mxu0 0.0
        %1456 = vmatpush2.msra.mxu0 0.0
        %1457 = vmatprep.subr.mxu0 0.0
        %1458 = vmatpush2.msra.mxu0 0.0
        %1459 = vmatprep.mubr.f32.mxu0 0.0
        %1460 = vmatmul.mubr.f32.gmra.mxu0 %v1300
        %v1461 = vpop.f32.mrf.mxu0
        %v1462 = vadd.f32 0.0, %v1461
        %v1463 = vpop.f32.mrf.mxu0
        %1464 = vmatprep.mubr.f32.mxu0 0.0
        %1465 = vmatmul.mubr.f32.gmra.mxu0 %v1303
        %v1466 = vpop.f32.mrf.mxu0
        %v1467 = vadd.f32 0.0, %v1466
        %v1468 = vpop.f32.mrf.mxu0
        %1469 = vmatprep.mubr.f32.mxu0 0.0
        %1470 = vmatmul.mubr.f32.gmra.mxu0 %v1306
        %v1471 = vpop.f32.mrf.mxu0
        %v1472 = vadd.f32 0.0, %v1471
        %v1473 = vpop.f32.mrf.mxu0
        %1474 = vmatprep.mubr.f32.mxu0 0.0
        %1475 = vmatmul.mubr.f32.gmra.mxu0 %v1309
        %v1476 = vpop.f32.mrf.mxu0
        %v1477 = vadd.f32 0.0, %v1476
        %v1478 = vpop.f32.mrf.mxu0
        %1479 = vmatprep.mubr.f32.mxu0 0.0
        %1480 = vmatmul.mubr.f32.gmra.mxu0 %v1312
        %v1481 = vpop.f32.mrf.mxu0
        %v1482 = vadd.f32 0.0, %v1481
        %v1483 = vpop.f32.mrf.mxu0
        %1484 = vmatprep.mubr.f32.mxu0 0.0
        %1485 = vmatmul.mubr.f32.gmra.mxu0 %v1315
        %v1486 = vpop.f32.mrf.mxu0
        %v1487 = vadd.f32 0.0, %v1486
        %v1488 = vpop.f32.mrf.mxu0
        %1489 = vmatprep.mubr.f32.mxu0 0.0
        %1490 = vmatmul.mubr.f32.gmra.mxu0 %v1318
        %v1491 = vpop.f32.mrf.mxu0
        %v1492 = vadd.f32 0.0, %v1491
        %v1493 = vpop.f32.mrf.mxu0
        %1494 = vmatprep.mubr.f32.mxu0 0.0
        %1495 = vmatmul.mubr.f32.gmra.mxu0 %v1321
        %v1496 = vpop.f32.mrf.mxu0
        %v1497 = vadd.f32 0.0, %v1496
        %v1498 = vpop.f32.mrf.mxu0
        %1499 = vmatprep.mubr.f32.mxu0 0.0
        %1500 = vmatmul.mubr.f32.gmra.mxu0 %v1324
        %v1501 = vpop.f32.mrf.mxu0
        %v1502 = vadd.f32 0.0, %v1501
        %v1503 = vpop.f32.mrf.mxu0
        %1504 = vmatprep.mubr.f32.mxu0 0.0
        %1505 = vmatmul.mubr.f32.gmra.mxu0 %v1327
        %v1506 = vpop.f32.mrf.mxu0
        %v1507 = vadd.f32 0.0, %v1506
        %v1508 = vpop.f32.mrf.mxu0
        %1509 = vmatprep.mubr.f32.mxu0 0.0
        %1510 = vmatmul.mubr.f32.gmra.mxu0 %v1330
        %v1511 = vpop.f32.mrf.mxu0
        %v1512 = vadd.f32 0.0, %v1511
        %v1513 = vpop.f32.mrf.mxu0
        %1514 = vmatprep.mubr.f32.mxu0 0.0
        %1515 = vmatmul.mubr.f32.gmra.mxu0 %v1333
        %v1516 = vpop.f32.mrf.mxu0
        %v1517 = vadd.f32 0.0, %v1516
        %v1518 = vpop.f32.mrf.mxu0
        %1519 = vmatprep.mubr.f32.mxu0 0.0
        %1520 = vmatmul.mubr.f32.gmra.mxu0 %v1336
        %v1521 = vpop.f32.mrf.mxu0
        %v1522 = vadd.f32 0.0, %v1521
        %v1523 = vpop.f32.mrf.mxu0
        %1524 = vmatprep.mubr.f32.mxu0 0.0
        %1525 = vmatmul.mubr.f32.gmra.mxu0 %v1339
        %v1526 = vpop.f32.mrf.mxu0
        %v1527 = vadd.f32 0.0, %v1526
        %v1528 = vpop.f32.mrf.mxu0
        %1529 = vmatprep.mubr.f32.mxu0 0.0
        %1530 = vmatmul.mubr.f32.gmra.mxu0 %v1342
        %v1531 = vpop.f32.mrf.mxu0
        %v1532 = vadd.f32 0.0, %v1531
        %v1533 = vpop.f32.mrf.mxu0
        %1534 = vmatprep.mubr.f32.mxu0 0.0
        %1535 = vmatmul.mubr.f32.gmra.mxu0 %v1345
        %v1536 = vpop.f32.mrf.mxu0
        %v1537 = vadd.f32 0.0, %v1536
        %v1538 = vpop.f32.mrf.mxu0
        %1539 = vmatprep.mubr.f32.mxu0 0.0
        %1540 = vmatmul.mubr.f32.gmra.mxu0 %v1348
        %v1541 = vpop.f32.mrf.mxu0
        %v1542 = vadd.f32 0.0, %v1541
        %v1543 = vpop.f32.mrf.mxu0
        %1544 = vmatprep.mubr.f32.mxu0 0.0
        %1545 = vmatmul.mubr.f32.gmra.mxu0 %v1351
        %v1546 = vpop.f32.mrf.mxu0
        %v1547 = vadd.f32 0.0, %v1546
        %v1548 = vpop.f32.mrf.mxu0
        %1549 = vmatprep.mubr.f32.mxu0 0.0
        %1550 = vmatmul.mubr.f32.gmra.mxu0 %v1354
        %v1551 = vpop.f32.mrf.mxu0
        %v1552 = vadd.f32 0.0, %v1551
        %v1553 = vpop.f32.mrf.mxu0
        %1554 = vmatprep.mubr.f32.mxu0 0.0
        %1555 = vmatmul.mubr.f32.gmra.mxu0 %v1357
        %v1556 = vpop.f32.mrf.mxu0
        %v1557 = vadd.f32 0.0, %v1556
        %v1558 = vpop.f32.mrf.mxu0
        %1559 = vmatprep.mubr.f32.mxu0 0.0
        %1560 = vmatmul.mubr.f32.gmra.mxu0 %v1360
        %v1561 = vpop.f32.mrf.mxu0
        %v1562 = vadd.f32 0.0, %v1561
        %v1563 = vpop.f32.mrf.mxu0
        %1564 = vmatprep.mubr.f32.mxu0 0.0
        %1565 = vmatmul.mubr.f32.gmra.mxu0 %v1363
        %v1566 = vpop.f32.mrf.mxu0
        %v1567 = vadd.f32 0.0, %v1566
        %v1568 = vpop.f32.mrf.mxu0
        %1569 = vmatprep.mubr.f32.mxu0 0.0
        %1570 = vmatmul.mubr.f32.gmra.mxu0 %v1366
        %v1571 = vpop.f32.mrf.mxu0
        %v1572 = vadd.f32 0.0, %v1571
        %v1573 = vpop.f32.mrf.mxu0
        %1574 = vmatprep.mubr.f32.mxu0 0.0
        %1575 = vmatmul.mubr.f32.gmra.mxu0 %v1369
        %v1576 = vpop.f32.mrf.mxu0
        %v1577 = vadd.f32 0.0, %v1576
        %v1578 = vpop.f32.mrf.mxu0
        %1579 = vmatprep.mubr.f32.mxu0 0.0
        %1580 = vmatmul.mubr.f32.gmra.mxu0 %v1372
        %v1581 = vpop.f32.mrf.mxu0
        %v1582 = vadd.f32 0.0, %v1581
        %v1583 = vpop.f32.mrf.mxu0
        %1584 = vmatprep.mubr.f32.mxu0 0.0
        %1585 = vmatmul.mubr.f32.gmra.mxu0 %v1375
        %v1586 = vpop.f32.mrf.mxu0
        %v1587 = vadd.f32 0.0, %v1586
        %v1588 = vpop.f32.mrf.mxu0
        %1589 = vmatprep.mubr.f32.mxu0 0.0
        %1590 = vmatmul.mubr.f32.gmra.mxu0 %v1378
        %v1591 = vpop.f32.mrf.mxu0
        %v1592 = vadd.f32 0.0, %v1591
        %v1593 = vpop.f32.mrf.mxu0
        %1594 = vmatprep.mubr.f32.mxu0 0.0
        %1595 = vmatmul.mubr.f32.gmra.mxu0 %v1381
        %v1596 = vpop.f32.mrf.mxu0
        %v1597 = vadd.f32 0.0, %v1596
        %v1598 = vpop.f32.mrf.mxu0
        %1599 = vmatprep.mubr.f32.mxu0 0.0
        %1600 = vmatmul.mubr.f32.gmra.mxu0 %v1384
        %v1601 = vpop.f32.mrf.mxu0
        %v1602 = vadd.f32 0.0, %v1601
        %v1603 = vpop.f32.mrf.mxu0
        %1604 = vmatprep.mubr.f32.mxu0 0.0
        %1605 = vmatmul.mubr.f32.gmra.mxu0 %v1387
        %v1606 = vpop.f32.mrf.mxu0
        %v1607 = vadd.f32 0.0, %v1606
        %v1608 = vpop.f32.mrf.mxu0
        %1609 = vmatprep.mubr.f32.mxu0 0.0
        %1610 = vmatmul.mubr.f32.gmra.mxu0 %v1390
        %v1611 = vpop.f32.mrf.mxu0
        %v1612 = vadd.f32 0.0, %v1611
        %v1613 = vpop.f32.mrf.mxu0
        %1614 = vmatprep.mubr.f32.mxu0 0.0
        %1615 = vmatmul.mubr.f32.gmra.mxu0 %v1393
        %v1616 = vpop.f32.mrf.mxu0
        %v1617 = vadd.f32 0.0, %v1616
        %v1618 = vpop.f32.mrf.mxu0
        %1619 = vdwg.mxu0
        %v1620 = vmul.f32 %v1462, 2.0
        %v1621 = vmul.f32 %v1467, 2.0
        %v1622 = vmul.f32 %v1472, 2.0
        %v1623 = vmul.f32 %v1477, 2.0
        %v1624 = vmul.f32 %v1482, 2.0
        %v1625 = vmul.f32 %v1487, 2.0
        %v1626 = vmul.f32 %v1492, 2.0
        %v1627 = vmul.f32 %v1497, 2.0
        %v1628 = vmul.f32 %v1502, 2.0
        %v1629 = vmul.f32 %v1507, 2.0
        %v1630 = vmul.f32 %v1512, 2.0
        %v1631 = vmul.f32 %v1517, 2.0
        %v1632 = vmul.f32 %v1522, 2.0
        %v1633 = vmul.f32 %v1527, 2.0
        %v1634 = vmul.f32 %v1532, 2.0
        %v1635 = vmul.f32 %v1537, 2.0
        %v1636 = vmul.f32 %v1542, 2.0
        %v1637 = vmul.f32 %v1547, 2.0
        %v1638 = vmul.f32 %v1552, 2.0
        %v1639 = vmul.f32 %v1557, 2.0
        %v1640 = vmul.f32 %v1562, 2.0
        %v1641 = vmul.f32 %v1567, 2.0
        %v1642 = vmul.f32 %v1572, 2.0
        %v1643 = vmul.f32 %v1577, 2.0
        %v1644 = vmul.f32 %v1582, 2.0
        %v1645 = vmul.f32 %v1587, 2.0
        %v1646 = vmul.f32 %v1592, 2.0
        %v1647 = vmul.f32 %v1597, 2.0
        %v1648 = vmul.f32 %v1602, 2.0
        %v1649 = vmul.f32 %v1607, 2.0
        %v1650 = vmul.f32 %v1612, 2.0
        %v1651 = vmul.f32 %v1617, 2.0
        %v1652 = vsub.f32 %v1201, %v1620
        %v1653 = vsub.f32 %v1204, %v1621
        %v1654 = vsub.f32 %v1207, %v1622
        %v1655 = vsub.f32 %v1210, %v1623
        %v1656 = vsub.f32 %v1213, %v1624
        %v1657 = vsub.f32 %v1216, %v1625
        %v1658 = vsub.f32 %v1219, %v1626
        %v1659 = vsub.f32 %v1222, %v1627
        %v1660 = vsub.f32 %v1225, %v1628
        %v1661 = vsub.f32 %v1228, %v1629
        %v1662 = vsub.f32 %v1231, %v1630
        %v1663 = vsub.f32 %v1234, %v1631
        %v1664 = vsub.f32 %v1237, %v1632
        %v1665 = vsub.f32 %v1240, %v1633
        %v1666 = vsub.f32 %v1243, %v1634
        %v1667 = vsub.f32 %v1246, %v1635
        %v1668 = vsub.f32 %v1249, %v1636
        %v1669 = vsub.f32 %v1252, %v1637
        %v1670 = vsub.f32 %v1255, %v1638
        %v1671 = vsub.f32 %v1258, %v1639
        %v1672 = vsub.f32 %v1261, %v1640
        %v1673 = vsub.f32 %v1264, %v1641
        %v1674 = vsub.f32 %v1267, %v1642
        %v1675 = vsub.f32 %v1270, %v1643
        %v1676 = vsub.f32 %v1273, %v1644
        %v1677 = vsub.f32 %v1276, %v1645
        %v1678 = vsub.f32 %v1279, %v1646
        %v1679 = vsub.f32 %v1282, %v1647
        %v1680 = vsub.f32 %v1285, %v1648
        %v1681 = vsub.f32 %v1288, %v1649
        %v1682 = vsub.f32 %v1291, %v1650
        %v1683 = vsub.f32 %v1294, %v1651
        %v1684 = vld [vmem:[%s6] sm:$0x1]
        %v1686 = vlaneseq
        %v1687 = vshrl.u32 %v1686, 7
        %v1688 = vsub.s32 0, %v1687
        %v1689 = vrot.slane %v1684, %v1688
        %v1691 = vadd.f32 %v1652, %v1689
        %v1692 = vadd.f32 %v1653, %v1689
        %v1693 = vadd.f32 %v1654, %v1689
        %v1694 = vadd.f32 %v1655, %v1689
        %v1695 = vadd.f32 %v1656, %v1689
        %v1696 = vadd.f32 %v1657, %v1689
        %v1697 = vadd.f32 %v1658, %v1689
        %v1698 = vadd.f32 %v1659, %v1689
        %v1699 = vadd.f32 %v1660, %v1689
        %v1700 = vadd.f32 %v1661, %v1689
        %v1701 = vadd.f32 %v1662, %v1689
        %v1702 = vadd.f32 %v1663, %v1689
        %v1703 = vadd.f32 %v1664, %v1689
        %v1704 = vadd.f32 %v1665, %v1689
        %v1705 = vadd.f32 %v1666, %v1689
        %v1706 = vadd.f32 %v1667, %v1689
        %v1707 = vadd.f32 %v1668, %v1689
        %v1708 = vadd.f32 %v1669, %v1689
        %v1709 = vadd.f32 %v1670, %v1689
        %v1710 = vadd.f32 %v1671, %v1689
        %v1711 = vadd.f32 %v1672, %v1689
        %v1712 = vadd.f32 %v1673, %v1689
        %v1713 = vadd.f32 %v1674, %v1689
        %v1714 = vadd.f32 %v1675, %v1689
        %v1715 = vadd.f32 %v1676, %v1689
        %v1716 = vadd.f32 %v1677, %v1689
        %v1717 = vadd.f32 %v1678, %v1689
        %v1718 = vadd.f32 %v1679, %v1689
        %v1719 = vadd.f32 %v1680, %v1689
        %v1720 = vadd.f32 %v1681, %v1689
        %v1721 = vadd.f32 %v1682, %v1689
        %v1722 = vadd.f32 %v1683, %v1689
        %v1723 = vmax.f32 %v1691, 0.0
        %v1724 = vmax.f32 %v1692, 0.0
        %v1725 = vmax.f32 %v1693, 0.0
        %v1726 = vmax.f32 %v1694, 0.0
        %v1727 = vmax.f32 %v1695, 0.0
        %v1728 = vmax.f32 %v1696, 0.0
        %v1729 = vmax.f32 %v1697, 0.0
        %v1730 = vmax.f32 %v1698, 0.0
        %v1731 = vmax.f32 %v1699, 0.0
        %v1732 = vmax.f32 %v1700, 0.0
        %v1733 = vmax.f32 %v1701, 0.0
        %v1734 = vmax.f32 %v1702, 0.0
        %v1735 = vmax.f32 %v1703, 0.0
        %v1736 = vmax.f32 %v1704, 0.0
        %v1737 = vmax.f32 %v1705, 0.0
        %v1738 = vmax.f32 %v1706, 0.0
        %v1739 = vmax.f32 %v1707, 0.0
        %v1740 = vmax.f32 %v1708, 0.0
        %v1741 = vmax.f32 %v1709, 0.0
        %v1742 = vmax.f32 %v1710, 0.0
        %v1743 = vmax.f32 %v1711, 0.0
        %v1744 = vmax.f32 %v1712, 0.0
        %v1745 = vmax.f32 %v1713, 0.0
        %v1746 = vmax.f32 %v1714, 0.0
        %v1747 = vmax.f32 %v1715, 0.0
        %v1748 = vmax.f32 %v1716, 0.0
        %v1749 = vmax.f32 %v1717, 0.0
        %v1750 = vmax.f32 %v1718, 0.0
        %v1751 = vmax.f32 %v1719, 0.0
        %v1752 = vmax.f32 %v1720, 0.0
        %v1753 = vmax.f32 %v1721, 0.0
        %v1754 = vmax.f32 %v1722, 0.0
        %v1755 = vadd.f32 %v1723, 0.0001
        %v1756 = vadd.f32 %v1724, 0.0001
        %v1757 = vadd.f32 %v1725, 0.0001
        %v1758 = vadd.f32 %v1726, 0.0001
        %v1759 = vadd.f32 %v1727, 0.0001
        %v1760 = vadd.f32 %v1728, 0.0001
        %v1761 = vadd.f32 %v1729, 0.0001
        %v1762 = vadd.f32 %v1730, 0.0001
        %v1763 = vadd.f32 %v1731, 0.0001
        %v1764 = vadd.f32 %v1732, 0.0001
        %v1765 = vadd.f32 %v1733, 0.0001
        %v1766 = vadd.f32 %v1734, 0.0001
        %v1767 = vadd.f32 %v1735, 0.0001
        %v1768 = vadd.f32 %v1736, 0.0001
        %v1769 = vadd.f32 %v1737, 0.0001
        %v1770 = vadd.f32 %v1738, 0.0001
        %v1771 = vadd.f32 %v1739, 0.0001
        %v1772 = vadd.f32 %v1740, 0.0001
        %v1773 = vadd.f32 %v1741, 0.0001
        %v1774 = vadd.f32 %v1742, 0.0001
        %v1775 = vadd.f32 %v1743, 0.0001
        %v1776 = vadd.f32 %v1744, 0.0001
        %v1777 = vadd.f32 %v1745, 0.0001
        %v1778 = vadd.f32 %v1746, 0.0001
        %v1779 = vadd.f32 %v1747, 0.0001
        %v1780 = vadd.f32 %v1748, 0.0001
        %v1781 = vadd.f32 %v1749, 0.0001
        %v1782 = vadd.f32 %v1750, 0.0001
        %v1783 = vadd.f32 %v1751, 0.0001
        %v1784 = vadd.f32 %v1752, 0.0001
        %v1785 = vadd.f32 %v1753, 0.0001
        %v1786 = vadd.f32 %v1754, 0.0001
        %v1787 = vrcp.pop %v1755
        %v1788 = vrcp.pop %v1756
        %v1789 = vrcp.pop %v1757
        %v1790 = vrcp.pop %v1758
        %v1791 = vrcp.pop %v1759
        %v1792 = vrcp.pop %v1760
        %v1793 = vrcp.pop %v1761
        %v1794 = vrcp.pop %v1762
        %v1795 = vrcp.pop %v1763
        %v1796 = vrcp.pop %v1764
        %v1797 = vrcp.pop %v1765
        %v1798 = vrcp.pop %v1766
        %v1799 = vrcp.pop %v1767
        %v1800 = vrcp.pop %v1768
        %v1801 = vrcp.pop %v1769
        %v1802 = vrcp.pop %v1770
        %v1803 = vrcp.pop %v1771
        %v1804 = vrcp.pop %v1772
        %v1805 = vrcp.pop %v1773
        %v1806 = vrcp.pop %v1774
        %v1807 = vrcp.pop %v1775
        %v1808 = vrcp.pop %v1776
        %v1809 = vrcp.pop %v1777
        %v1810 = vrcp.pop %v1778
        %v1811 = vrcp.pop %v1779
        %v1812 = vrcp.pop %v1780
        %v1813 = vrcp.pop %v1781
        %v1814 = vrcp.pop %v1782
        %v1815 = vrcp.pop %v1783
        %v1816 = vrcp.pop %v1784
        %v1817 = vrcp.pop %v1785
        %v1818 = vrcp.pop %v1786
        %v1819 = vmul.f32 %v1787, 0.9999
        %v1820 = vmul.f32 %v1788, 0.9999
        %v1821 = vmul.f32 %v1789, 0.9999
        %v1822 = vmul.f32 %v1790, 0.9999
        %v1823 = vmul.f32 %v1791, 0.9999
        %v1824 = vmul.f32 %v1792, 0.9999
        %v1825 = vmul.f32 %v1793, 0.9999
        %v1826 = vmul.f32 %v1794, 0.9999
        %v1827 = vmul.f32 %v1795, 0.9999
        %v1828 = vmul.f32 %v1796, 0.9999
        %v1829 = vmul.f32 %v1797, 0.9999
        %v1830 = vmul.f32 %v1798, 0.9999
        %v1831 = vmul.f32 %v1799, 0.9999
        %v1832 = vmul.f32 %v1800, 0.9999
        %v1833 = vmul.f32 %v1801, 0.9999
        %v1834 = vmul.f32 %v1802, 0.9999
        %v1835 = vmul.f32 %v1803, 0.9999
        %v1836 = vmul.f32 %v1804, 0.9999
        %v1837 = vmul.f32 %v1805, 0.9999
        %v1838 = vmul.f32 %v1806, 0.9999
        %v1839 = vmul.f32 %v1807, 0.9999
        %v1840 = vmul.f32 %v1808, 0.9999
        %v1841 = vmul.f32 %v1809, 0.9999
        %v1842 = vmul.f32 %v1810, 0.9999
        %v1843 = vmul.f32 %v1811, 0.9999
        %v1844 = vmul.f32 %v1812, 0.9999
        %v1845 = vmul.f32 %v1813, 0.9999
        %v1846 = vmul.f32 %v1814, 0.9999
        %v1847 = vmul.f32 %v1815, 0.9999
        %v1848 = vmul.f32 %v1816, 0.9999
        %v1849 = vmul.f32 %v1817, 0.9999
        %v1850 = vmul.f32 %v1818, 0.9999
        %v1851 = vadd.f32 %v1819, 1.0
        %v1852 = vadd.f32 %v1820, 1.0
        %v1853 = vadd.f32 %v1821, 1.0
        %v1854 = vadd.f32 %v1822, 1.0
        %v1855 = vadd.f32 %v1823, 1.0
        %v1856 = vadd.f32 %v1824, 1.0
        %v1857 = vadd.f32 %v1825, 1.0
        %v1858 = vadd.f32 %v1826, 1.0
        %v1859 = vadd.f32 %v1827, 1.0
        %v1860 = vadd.f32 %v1828, 1.0
        %v1861 = vadd.f32 %v1829, 1.0
        %v1862 = vadd.f32 %v1830, 1.0
        %v1863 = vadd.f32 %v1831, 1.0
        %v1864 = vadd.f32 %v1832, 1.0
        %v1865 = vadd.f32 %v1833, 1.0
        %v1866 = vadd.f32 %v1834, 1.0
        %v1867 = vadd.f32 %v1835, 1.0
        %v1868 = vadd.f32 %v1836, 1.0
        %v1869 = vadd.f32 %v1837, 1.0
        %v1870 = vadd.f32 %v1838, 1.0
        %v1871 = vadd.f32 %v1839, 1.0
        %v1872 = vadd.f32 %v1840, 1.0
        %v1873 = vadd.f32 %v1841, 1.0
        %v1874 = vadd.f32 %v1842, 1.0
        %v1875 = vadd.f32 %v1843, 1.0
        %v1876 = vadd.f32 %v1844, 1.0
        %v1877 = vadd.f32 %v1845, 1.0
        %v1878 = vadd.f32 %v1846, 1.0
        %v1879 = vadd.f32 %v1847, 1.0
        %v1880 = vadd.f32 %v1848, 1.0
        %v1881 = vadd.f32 %v1849, 1.0
        %v1882 = vadd.f32 %v1850, 1.0
        %v1883 = vlog2.pop %v1851
        %v1884 = vmul.f32 %v1883, 0.6931472
        %v1885 = vlog2.pop %v1852
        %v1886 = vmul.f32 %v1885, 0.6931472
        %v1887 = vlog2.pop %v1853
        %v1888 = vmul.f32 %v1887, 0.6931472
        %v1889 = vlog2.pop %v1854
        %v1890 = vmul.f32 %v1889, 0.6931472
        %v1891 = vlog2.pop %v1855
        %v1892 = vmul.f32 %v1891, 0.6931472
        %v1893 = vlog2.pop %v1856
        %v1894 = vmul.f32 %v1893, 0.6931472
        %v1895 = vlog2.pop %v1857
        %v1896 = vmul.f32 %v1895, 0.6931472
        %v1897 = vlog2.pop %v1858
        %v1898 = vmul.f32 %v1897, 0.6931472
        %v1899 = vlog2.pop %v1859
        %v1900 = vmul.f32 %v1899, 0.6931472
        %v1901 = vlog2.pop %v1860
        %v1902 = vmul.f32 %v1901, 0.6931472
        %v1903 = vlog2.pop %v1861
        %v1904 = vmul.f32 %v1903, 0.6931472
        %v1905 = vlog2.pop %v1862
        %v1906 = vmul.f32 %v1905, 0.6931472
        %v1907 = vlog2.pop %v1863
        %v1908 = vmul.f32 %v1907, 0.6931472
        %v1909 = vlog2.pop %v1864
        %v1910 = vmul.f32 %v1909, 0.6931472
        %v1911 = vlog2.pop %v1865
        %v1912 = vmul.f32 %v1911, 0.6931472
        %v1913 = vlog2.pop %v1866
        %v1914 = vmul.f32 %v1913, 0.6931472
        %v1915 = vlog2.pop %v1867
        %v1916 = vmul.f32 %v1915, 0.6931472
        %v1917 = vlog2.pop %v1868
        %v1918 = vmul.f32 %v1917, 0.6931472
        %v1919 = vlog2.pop %v1869
        %v1920 = vmul.f32 %v1919, 0.6931472
        %v1921 = vlog2.pop %v1870
        %v1922 = vmul.f32 %v1921, 0.6931472
        %v1923 = vlog2.pop %v1871
        %v1924 = vmul.f32 %v1923, 0.6931472
        %v1925 = vlog2.pop %v1872
        %v1926 = vmul.f32 %v1925, 0.6931472
        %v1927 = vlog2.pop %v1873
        %v1928 = vmul.f32 %v1927, 0.6931472
        %v1929 = vlog2.pop %v1874
        %v1930 = vmul.f32 %v1929, 0.6931472
        %v1931 = vlog2.pop %v1875
        %v1932 = vmul.f32 %v1931, 0.6931472
        %v1933 = vlog2.pop %v1876
        %v1934 = vmul.f32 %v1933, 0.6931472
        %v1935 = vlog2.pop %v1877
        %v1936 = vmul.f32 %v1935, 0.6931472
        %v1937 = vlog2.pop %v1878
        %v1938 = vmul.f32 %v1937, 0.6931472
        %v1939 = vlog2.pop %v1879
        %v1940 = vmul.f32 %v1939, 0.6931472
        %v1941 = vlog2.pop %v1880
        %v1942 = vmul.f32 %v1941, 0.6931472
        %v1943 = vlog2.pop %v1881
        %v1944 = vmul.f32 %v1943, 0.6931472
        %v1945 = vlog2.pop %v1882
        %v1946 = vmul.f32 %v1945, 0.6931472
        %v1947 = vmax.f32 %v1884, %v1892
        %v1948 = vmax.f32 %v1886, %v1894
        %v1949 = vmax.f32 %v1888, %v1896
        %v1950 = vmax.f32 %v1890, %v1898
        %v1951 = vmax.f32 %v1947, %v1900
        %v1952 = vmax.f32 %v1948, %v1902
        %v1953 = vmax.f32 %v1949, %v1904
        %v1954 = vmax.f32 %v1950, %v1906
        %v1955 = vmax.f32 %v1951, %v1908
        %v1956 = vmax.f32 %v1952, %v1910
        %v1957 = vmax.f32 %v1953, %v1912
        %v1958 = vmax.f32 %v1954, %v1914
        %v1959 = vmax.f32 %v1955, %v1916
        %v1960 = vmax.f32 %v1956, %v1918
        %v1961 = vmax.f32 %v1957, %v1920
        %v1962 = vmax.f32 %v1958, %v1922
        %v1963 = vmax.f32 %v1959, %v1924
        %v1964 = vmax.f32 %v1960, %v1926
        %v1965 = vmax.f32 %v1961, %v1928
        %v1966 = vmax.f32 %v1962, %v1930
        %v1967 = vmax.f32 %v1963, %v1932
        %v1968 = vmax.f32 %v1964, %v1934
        %v1969 = vmax.f32 %v1965, %v1936
        %v1970 = vmax.f32 %v1966, %v1938
        %v1971 = vmax.f32 %v1967, %v1940
        %v1972 = vmax.f32 %v1968, %v1942
        %v1973 = vmax.f32 %v1969, %v1944
        %v1974 = vmax.f32 %v1970, %v1946
        %v1975 = vmax.f32 %v1971, %v1972
        %v1976 = vmax.f32 %v1973, %v1974
        %v1977 = vmax.f32 %v1975, %v1976
        %v1978 = vrot.slane %v1977, 4
        %v1979 = vmax.f32 %v1977, %v1978
        %v1980 = vrot.slane %v1979, 2
        %v1981 = vmax.f32 %v1979, %v1980
        %v1982 = vrot.slane %v1981, 1
        %v1983 = vmax.f32 %v1981, %v1982
        %1984 = vst [vmem:[%s328] sm:$0x1] %v1983
        %v1985 = vld [vmem:[%s7] sm:$0xff]
        %v1986 = vld [vmem:[%s7 + $0x8] sm:$0xff]
        %v1987 = vld [vmem:[%s7 + $0x10] sm:$0xff]
        %v1988 = vld [vmem:[%s7 + $0x18] sm:$0xff]
        %v1989 = vld [vmem:[%s7 + $0x20] sm:$0xff]
        %v1990 = vld [vmem:[%s7 + $0x28] sm:$0xff]
        %v1991 = vld [vmem:[%s7 + $0x30] sm:$0xff]
        %v1992 = vld [vmem:[%s7 + $0x38] sm:$0xff]
        %v1993 = vld [vmem:[%s7 + $0x40] sm:$0xff]
        %v1994 = vld [vmem:[%s7 + $0x48] sm:$0xff]
        %v1995 = vld [vmem:[%s7 + $0x50] sm:$0xff]
        %v1996 = vld [vmem:[%s7 + $0x58] sm:$0xff]
        %v1997 = vld [vmem:[%s7 + $0x60] sm:$0xff]
        %v1998 = vld [vmem:[%s7 + $0x68] sm:$0xff]
        %v1999 = vld [vmem:[%s7 + $0x70] sm:$0xff]
        %v2000 = vld [vmem:[%s7 + $0x78] sm:$0xff]
        %2001 = vmatprep.subr.mxu0 0.0
        %2002 = vmatpush1.msra.mxu0 %v2000
        %2003 = vmatprep.subr.mxu0 0.0
        %2004 = vmatpush1.msra.mxu0 %v1999
        %2005 = vmatprep.subr.mxu0 0.0
        %2006 = vmatpush1.msra.mxu0 %v1998
        %2007 = vmatprep.subr.mxu0 0.0
        %2008 = vmatpush1.msra.mxu0 %v1997
        %2009 = vmatprep.subr.mxu0 0.0
        %2010 = vmatpush1.msra.mxu0 %v1996
        %2011 = vmatprep.subr.mxu0 0.0
        %2012 = vmatpush1.msra.mxu0 %v1995
        %2013 = vmatprep.subr.mxu0 0.0
        %2014 = vmatpush1.msra.mxu0 %v1994
        %2015 = vmatprep.subr.mxu0 0.0
        %2016 = vmatpush1.msra.mxu0 %v1993
        %2017 = vmatprep.subr.mxu0 0.0
        %2018 = vmatpush1.msra.mxu0 %v1992
        %2019 = vmatprep.subr.mxu0 0.0
        %2020 = vmatpush1.msra.mxu0 %v1991
        %2021 = vmatprep.subr.mxu0 0.0
        %2022 = vmatpush1.msra.mxu0 %v1990
        %2023 = vmatprep.subr.mxu0 0.0
        %2024 = vmatpush1.msra.mxu0 %v1989
        %2025 = vmatprep.subr.mxu0 0.0
        %2026 = vmatpush1.msra.mxu0 %v1988
        %2027 = vmatprep.subr.mxu0 0.0
        %2028 = vmatpush1.msra.mxu0 %v1987
        %2029 = vmatprep.subr.mxu0 0.0
        %2030 = vmatpush1.msra.mxu0 %v1986
        %2031 = vmatprep.subr.mxu0 0.0
        %2032 = vmatpush1.msra.mxu0 %v1985
        %2033 = vmatprep.subr.mxu0 0.0
        %2034 = vmatpush2.msra.mxu0 0.0
        %2035 = vmatprep.subr.mxu0 0.0
        %2036 = vmatpush2.msra.mxu0 0.0
        %2037 = vmatprep.subr.mxu0 0.0
        %2038 = vmatpush2.msra.mxu0 0.0
        %2039 = vmatprep.subr.mxu0 0.0
        %2040 = vmatpush2.msra.mxu0 0.0
        %2041 = vmatprep.subr.mxu0 0.0
        %2042 = vmatpush2.msra.mxu0 0.0
        %2043 = vmatprep.subr.mxu0 0.0
        %2044 = vmatpush2.msra.mxu0 0.0
        %2045 = vmatprep.subr.mxu0 0.0
        %2046 = vmatpush2.msra.mxu0 0.0
        %2047 = vmatprep.subr.mxu0 0.0
        %2048 = vmatpush2.msra.mxu0 0.0
        %2049 = vmatprep.subr.mxu0 0.0
        %2050 = vmatpush2.msra.mxu0 0.0
        %2051 = vmatprep.subr.mxu0 0.0
        %2052 = vmatpush2.msra.mxu0 0.0
        %2053 = vmatprep.subr.mxu0 0.0
        %2054 = vmatpush2.msra.mxu0 0.0
        %2055 = vmatprep.subr.mxu0 0.0
        %2056 = vmatpush2.msra.mxu0 0.0
        %2057 = vmatprep.subr.mxu0 0.0
        %2058 = vmatpush2.msra.mxu0 0.0
        %2059 = vmatprep.subr.mxu0 0.0
        %2060 = vmatpush2.msra.mxu0 0.0
        %2061 = vmatprep.subr.mxu0 0.0
        %2062 = vmatpush2.msra.mxu0 0.0
        %2063 = vmatprep.subr.mxu0 0.0
        %2064 = vmatpush2.msra.mxu0 0.0
        %2065 = vmatprep.mubr.f32.mxu0 0.0
        %2066 = vmatmul.mubr.f32.gmra.mxu0 %v1983
        %v2067 = vpop.f32.mrf.mxu0
        %v2068 = vadd.f32 0.0, %v2067
        %v2069 = vpop.f32.mrf.mxu0
        %2070 = vdwg.mxu0
        %2071 = vst [vmem:[%s334] sm:$0x1] %v2068
        %s2072 = sand.u32 %s208, 1
        %s2073 = scalar_lea.sflag [#allocation3], %s2072
        %s2074 = sand.u32 %s208, 1
        %s2075 = scalar_lea.vmem [#allocation2], %s2074
        %s2076 = sand.u32 %s234, 1
        %s2077 = scalar_lea.sflag [#allocation5], %s2076
        %s2078 = sand.u32 %s234, 1
        %s2079 = scalar_lea.vmem [#allocation4], %s2078
        // Predicated region
        $region53: #{cabrnet_apply.1} parent=51 // pred_check
          %p2080 = pneg %p218
        $region54: #{cabrnet_apply.1} parent=51 // pred_check_branch
          %2082 = sbr.rel (%p2080) target = $region56
        $region55: #{cabrnet_apply.1} parent=51 // pred_region
          %s2084 = ssub.s32 16, 16
          %2085 = vsyncadd %s2073, %s2084
          %s2086 = smul.addr %s27, 16
          %s2087 = scalar_lea.hbm %s8, %s2086
          %s2089 = sshll.u32 %s2075, 4
          %s2090 = int_to_ptr.vmem [resolvable:$true] %s2089
          %2092 = dma.vmem_to_hbm [thread:$0]  %s2090, 16, %s2087, %s2073
        $region56: #{cabrnet_apply.1} parent=51 // pred_fallthru
          _
        // Predicated region
        $region57: #{cabrnet_apply.1} parent=51 // pred_check
          %p2093 = pneg %p244
        $region58: #{cabrnet_apply.1} parent=51 // pred_check_branch
          %2095 = sbr.rel (%p2093) target = $region60
        $region59: #{cabrnet_apply.1} parent=51 // pred_region
          %s2097 = ssub.s32 16, 16
          %2098 = vsyncadd %s2077, %s2097
          %s2099 = smul.addr %s27, 16
          %s2100 = scalar_lea.hbm %s9, %s2099
          %s2102 = sshll.u32 %s2079, 4
          %s2103 = int_to_ptr.vmem [resolvable:$true] %s2102
          %2105 = dma.vmem_to_hbm [thread:$0]  %s2103, 16, %s2100, %s2077
        $region60: #{cabrnet_apply.1} parent=51 // pred_fallthru
          _
      $region52: #{cabrnet_apply.1} parent=5 // pred_fallthru
        _
      %p2106 = scmp.le.s32.totalorder 2, %s22
      // Predicated region
      $region61: #{cabrnet_apply.1} parent=5 // pred_check
        %p2107 = pneg %p2106
      $region62: #{cabrnet_apply.1} parent=5 // pred_check_branch
        %2109 = sbr.rel (%p2107) target = $region64
      $region63: #{cabrnet_apply.1} parent=5 // pred_region
        %s2110 = ssub.s32 %s22, 2
        // Predicated region
        $region65: #{cabrnet_apply.1} parent=63 // pred_check
          %p2111 = pneg %p224
        $region66: #{cabrnet_apply.1} parent=63 // pred_check_branch
          %2113 = sbr.rel (%p2111) target = $region68
        $region67: #{cabrnet_apply.1} parent=63 // pred_region
          %s2114 = sand.u32 %s209, 1
          %s2115 = scalar_lea.sflag [#allocation3], %s2114
          %s2116 = sand.u32 %s209, 1
          %s2117 = scalar_lea.vmem [#allocation2], %s2116
          %2118 = dma.done %s2115, 16
        $region68: #{cabrnet_apply.1} parent=63 // pred_fallthru
          _
        // Predicated region
        $region69: #{cabrnet_apply.1} parent=63 // pred_check
          %p2119 = pneg %p250
        $region70: #{cabrnet_apply.1} parent=63 // pred_check_branch
          %2121 = sbr.rel (%p2119) target = $region72
        $region71: #{cabrnet_apply.1} parent=63 // pred_region
          %s2122 = sand.u32 %s235, 1
          %s2123 = scalar_lea.sflag [#allocation5], %s2122
          %s2124 = sand.u32 %s235, 1
          %s2125 = scalar_lea.vmem [#allocation4], %s2124
          %2126 = dma.done %s2123, 16
        $region72: #{cabrnet_apply.1} parent=63 // pred_fallthru
          _
      $region64: #{cabrnet_apply.1} parent=5 // pred_fallthru
        _
    $region6: #{cabrnet_apply.1} parent=1 // loop_footer
      %s26 = sadd.s32 1, %s22
    $region7: #{cabrnet_apply.1} parent=1 // loop_footer_branch
      %21 = sbr.rel target = $region3
    $region8: #{cabrnet_apply.1} parent=1 // loop_exit
      _
    %2127 = vsyncpa [#allocation3], 1
    %s2128 = scalar_lea.sflag [#allocation3], 1
    %2129 = vsyncpa %s2128, 1
    %2130 = vsyncpa [#allocation5], 1
    %s2131 = scalar_lea.sflag [#allocation5], 1
    %2132 = vsyncpa %s2131, 1

</llo_original>
